<compile_context>
chip_gen: v6e
topology: v6e:2x2x1
jax: 0.10.0
libtpu: 0.0.40
codegen_flags: <defaults>
</compile_context>

<pallas_src>
import jax
import jax.numpy as jnp
from jax import lax
from jax.experimental import pallas as pl
from jax.experimental.pallas import tpu as pltpu


def _dwconv3x3_kernel(top_ref, mid_ref, bot_ref, w_ref, o_ref):
    # top_ref: (1, 1,  W, C)  row just above the strip (clamped; masked on strip 0)
    # mid_ref: (1, TH, W, C)  the strip itself
    # bot_ref: (1, 1,  W, C)  row just below the strip (clamped; masked on last strip)
    # w_ref:   (3, 3, C)      depthwise weights (HWC)
    # o_ref:   (1, TH, W, C)
    TH = o_ref.shape[1]
    W = o_ref.shape[2]
    C = o_ref.shape[3]
    f32 = jnp.float32

    i = pl.program_id(1)
    last = pl.num_programs(1) - 1

    # Halo rows come from clamped index maps; zero them where they stand in for
    # the conv's zero padding (above the first strip / below the last strip).
    top = top_ref[...].reshape(1, W, C).astype(f32) * (i > 0).astype(f32)
    bot = bot_ref[...].reshape(1, W, C).astype(f32) * (i < last).astype(f32)
    mid = mid_ref[...].reshape(TH, W, C).astype(f32)

    # (TH + 2, W, C) slab: strip plus one halo row on each side.  Axis-0 concat
    # is along the untiled (major) dim -> cheap stacking, one copy per strip.
    x = jnp.concatenate([top, mid, bot], axis=0)

    # W-shifted copies, built once per strip and reused by all three dy taps:
    #   xl[w] == x[w - 1]  (zero at w == 0)
    #   xr[w] == x[w + 1]  (zero at w == W - 1)
    zcol = jnp.zeros((TH + 2, 1, C), f32)
    xl = jnp.concatenate([zcol, x[:, : W - 1, :]], axis=1)
    xr = jnp.concatenate([x[:, 1:, :], zcol], axis=1)

    # Single weight read; hoist all 9 taps (already shaped for lane broadcast)
    # out of the unrolled accumulation loop.
    wt = w_ref[...].astype(f32).reshape(3, 3, 1, 1, C)
    taps = [[wt[dy, dx] for dx in range(3)] for dy in range(3)]

    # out[h, w] = sum_{dy,dx} in[h + dy - 1, w + dx - 1] * wt[dy, dx]
    # Row slices x*[dy:dy+TH] are along the leading (untiled) dim -> no data
    # movement within the (W, C) tiles.
    acc = jnp.zeros((TH, W, C), f32)
    for dy in range(3):
        acc = acc + xl[dy:dy + TH] * taps[dy][0]
        acc = acc + x[dy:dy + TH] * taps[dy][1]
        acc = acc + xr[dy:dy + TH] * taps[dy][2]

    o_ref[...] = acc.reshape(o_ref.shape).astype(o_ref.dtype)


def _pick_tile_h(H):
    """Strip height: largest divisor of H that is <= 28 rows, preferring an
    even strip count >= 2.

    Big strips amortize the ~0.35 us/grid-step fixed cost and shrink the
    2-halo-row re-read; an even strip count lets v7x's two TensorCores split
    the "parallel" strip axis evenly (H=56 -> TH=28 -> 2 strips).  The 28-row
    cap keeps per-step VMEM well inside v7x's 64 MiB.
    """
    candidates = [t for t in range(min(H, 28), 0, -1) if H % t == 0]
    for t in candidates:
        n = H // t
        if n >= 2 and n % 2 == 0:
            return t
    # Fallback: largest divisor <= 28 (single or odd strip count).
    # TODO(synk): for large prime H a cdiv grid with a masked tail strip would
    # avoid degenerating to tiny strips; not needed for this module (H = 56).
    return candidates[0] if candidates else H


def depthwise_conv3x3_nhwc(x_nhwc, w_hwc):
    """Depthwise 3x3, stride 1, pad 1.  x_nhwc: (N, H, W, C); w_hwc: (3, 3, C)."""
    N, H, W, C = x_nhwc.shape
    assert w_hwc.shape == (3, 3, C)
    TH = _pick_tile_h(H)
    n_strips = H // TH

    # Clamped halo index maps (block size 1 along H -> block index == row index).
    top_map = lambda n, i: (n, jnp.maximum(i * TH - 1, 0), 0, 0)
    mid_map = lambda n, i: (n, i, 0, 0)
    bot_map = lambda n, i: (n, jnp.minimum(i * TH + TH, H - 1), 0, 0)

    return pl.pallas_call(
        _dwconv3x3_kernel,
        out_shape=jax.ShapeDtypeStruct((N, H, W, C), x_nhwc.dtype),
        grid_spec=pltpu.PrefetchScalarGridSpec(
            num_scalar_prefetch=0,
            grid=(N, n_strips),
            in_specs=[
                pl.BlockSpec((1, 1, W, C), top_map),    # top halo row
                pl.BlockSpec((1, TH, W, C), mid_map),   # strip
                pl.BlockSpec((1, 1, W, C), bot_map),    # bottom halo row
                pl.BlockSpec((3, 3, C), lambda n, i: (0, 0, 0)),  # weights (resident)
            ],
            out_specs=pl.BlockSpec((1, TH, W, C), mid_map),
        ),
        compiler_params=pltpu.CompilerParams(
            dimension_semantics=("parallel", "parallel"),
            # TH=28 strips need ~15 MB (> v5e's 16 MiB default scoped VMEM);
            # 48 MiB keeps headroom on all generations (v7x physical = 64 MiB).
            vmem_limit_bytes=48 * 1024 * 1024,
        ),
    )(x_nhwc, x_nhwc, x_nhwc, w_hwc)


def depthwise_conv3x3_nchw(x_nchw, weight_oihw):
    """PyTorch-layout convenience wrapper (layout glue lives here; NHWC is the fast path)."""
    C = x_nchw.shape[1]
    assert weight_oihw.shape == (C, 1, 3, 3)
    w_hwc = jnp.transpose(weight_oihw[:, 0, :, :], (1, 2, 0))
    x_nhwc = jnp.transpose(x_nchw, (0, 2, 3, 1))
    y = depthwise_conv3x3_nhwc(x_nhwc, w_hwc)
    return jnp.transpose(y, (0, 3, 1, 2))


def _reference_nhwc(x_nhwc, w_hwc):
    C = x_nhwc.shape[-1]
    w_hwio = w_hwc[:, :, None, :]  # (3, 3, 1, C)
    return lax.conv_general_dilated(
        x_nhwc, w_hwio,
        window_strides=(1, 1), padding=((1, 1), (1, 1)),
        dimension_numbers=("NHWC", "HWIO", "NHWC"),
        feature_group_count=C)


if __name__ == "__main__":
    key = jax.random.PRNGKey(0)
    kx, kw, kx2 = jax.random.split(key, 3)

    # Deterministic weights in the PyTorch (C, 1, 3, 3) layout; C=288 fixed by the conv.
    C = 288
    fan_in = 1 * 3 * 3
    bound = 1.0 / (fan_in ** 0.5)
    weight = jax.random.uniform(kw, (C, 1, 3, 3), dtype=jnp.float32,
                                minval=-bound, maxval=bound)
    w_hwc = jnp.transpose(weight[:, 0, :, :], (1, 2, 0))  # (3, 3, C)

    # 1) Small-shape check (spatial 16), NHWC fast path.
    N, H, W = 1, 16, 16
    x_small = jax.random.normal(kx, (N, H, W, C), dtype=jnp.float32)
    out_small = jax.block_until_ready(depthwise_conv3x3_nhwc(x_small, w_hwc))
    ref_small = jax.block_until_ready(_reference_nhwc(x_small, w_hwc))
    if not jnp.allclose(out_small, ref_small, atol=1e-4, rtol=1e-4):
        raise AssertionError("Pallas depthwise conv (NHWC, 16x16) does not match reference")

    # 2) Module-shape check (1, 288, 56, 56) through the PyTorch-layout wrapper;
    #    exercises the TH=28 / 2-strip configuration used for the real model.
    x134 = jax.random.normal(kx2, (1, C, 56, 56), dtype=jnp.float32)
    out_nchw = jax.block_until_ready(depthwise_conv3x3_nchw(x134, weight))
    ref_nchw = jax.block_until_ready(
        jnp.transpose(
            _reference_nhwc(jnp.transpose(x134, (0, 2, 3, 1)), w_hwc), (0, 3, 1, 2)))
    if not jnp.allclose(out_nchw, ref_nchw, atol=1e-4, rtol=1e-4):
        raise AssertionError("Pallas depthwise conv (NCHW wrapper, 56x56) does not match reference")

    print("KERNEL_OK")
</pallas_src>

<mosaic_0001>
module attributes {stable_mosaic.version = 11 : i64} {
  func.func @_dwconv3x3_kernel(%arg0: i32, %arg1: i32, %arg2: memref<1x1x16x288xf32, #tpu.memory_space<vmem>>, %arg3: memref<1x8x16x288xf32, #tpu.memory_space<vmem>>, %arg4: memref<1x1x16x288xf32, #tpu.memory_space<vmem>>, %arg5: memref<3x3x288xf32, #tpu.memory_space<vmem>>, %arg6: memref<1x8x16x288xf32, #tpu.memory_space<vmem>>) attributes {dimension_semantics = [#tpu.dimension_semantics<parallel>, #tpu.dimension_semantics<parallel>], iteration_bounds = array<i64: 1, 2>, scalar_prefetch = 0 : i64, scratch_operands = 0 : i64, tpu.core_type = #tpu.core_type<tc>, window_params = [{transform_indices = @transform_0, window_bounds = array<i64: 1, 1, 16, 288>}, {transform_indices = @transform_1, window_bounds = array<i64: 1, 8, 16, 288>}, {transform_indices = @transform_2, window_bounds = array<i64: 1, 1, 16, 288>}, {pipeline_mode = #tpu.pipeline_mode<synchronous>, transform_indices = @transform_3, window_bounds = array<i64: 3, 3, 288>}, {transform_indices = @transform_4, window_bounds = array<i64: 1, 8, 16, 288>}]} {
    %c0 = arith.constant 0 : index
    %c0_0 = arith.constant 0 : index
    %c0_1 = arith.constant 0 : index
    %c0_2 = arith.constant 0 : index
    %0 = vector.load %arg2[%c0, %c0_0, %c0_1, %c0_2] : memref<1x1x16x288xf32, #tpu.memory_space<vmem>>, vector<1x1x16x288xf32>
    %1 = vector.shape_cast %0 : vector<1x1x16x288xf32> to vector<1x16x288xf32>
    %c0_i32 = arith.constant 0 : i32
    %2 = arith.cmpi sgt, %arg1, %c0_i32 : i32
    %3 = arith.extui %2 : i1 to i32
    %4 = arith.sitofp %3 : i32 to f32
    %5 = vector.broadcast %4 : f32 to vector<1x16x288xf32>
    %6 = arith.mulf %1, %5 : vector<1x16x288xf32>
    %c0_3 = arith.constant 0 : index
    %c0_4 = arith.constant 0 : index
    %c0_5 = arith.constant 0 : index
    %c0_6 = arith.constant 0 : index
    %7 = vector.load %arg4[%c0_3, %c0_4, %c0_5, %c0_6] : memref<1x1x16x288xf32, #tpu.memory_space<vmem>>, vector<1x1x16x288xf32>
    %8 = vector.shape_cast %7 : vector<1x1x16x288xf32> to vector<1x16x288xf32>
    %c1_i32 = arith.constant 1 : i32
    %9 = arith.cmpi slt, %arg1, %c1_i32 : i32
    %10 = arith.extui %9 : i1 to i32
    %11 = arith.sitofp %10 : i32 to f32
    %12 = vector.broadcast %11 : f32 to vector<1x16x288xf32>
    %13 = arith.mulf %8, %12 : vector<1x16x288xf32>
    %c0_7 = arith.constant 0 : index
    %c0_8 = arith.constant 0 : index
    %c0_9 = arith.constant 0 : index
    %c0_10 = arith.constant 0 : index
    %14 = vector.load %arg3[%c0_7, %c0_8, %c0_9, %c0_10] : memref<1x8x16x288xf32, #tpu.memory_space<vmem>>, vector<1x8x16x288xf32>
    %15 = vector.shape_cast %14 : vector<1x8x16x288xf32> to vector<8x16x288xf32>
    %16 = tpu.concatenate %6, %15, %13 in 0 : vector<1x16x288xf32>, vector<8x16x288xf32>, vector<1x16x288xf32> -> vector<10x16x288xf32>
    %cst = arith.constant 0.000000e+00 : f32
    %17 = vector.broadcast %cst : f32 to vector<10x1x288xf32>
    %18 = vector.extract_strided_slice %16 {offsets = [0, 0, 0], sizes = [10, 15, 288], strides = [1, 1, 1]} : vector<10x16x288xf32> to vector<10x15x288xf32>
    %19 = tpu.concatenate %17, %18 in 1 : vector<10x1x288xf32>, vector<10x15x288xf32> -> vector<10x16x288xf32>
    %20 = vector.extract_strided_slice %16 {offsets = [0, 1, 0], sizes = [10, 15, 288], strides = [1, 1, 1]} : vector<10x16x288xf32> to vector<10x15x288xf32>
    %21 = tpu.concatenate %20, %17 in 1 : vector<10x15x288xf32>, vector<10x1x288xf32> -> vector<10x16x288xf32>
    %c0_11 = arith.constant 0 : index
    %c0_12 = arith.constant 0 : index
    %c0_13 = arith.constant 0 : index
    %22 = vector.load %arg5[%c0_11, %c0_12, %c0_13] : memref<3x3x288xf32, #tpu.memory_space<vmem>>, vector<3x3x288xf32>
    %23 = vector.shape_cast %22 : vector<3x3x288xf32> to vector<3x3x1x1x288xf32>
    %24 = vector.extract_strided_slice %23 {offsets = [0, 0, 0, 0, 0], sizes = [1, 1, 1, 1, 288], strides = [1, 1, 1, 1, 1]} : vector<3x3x1x1x288xf32> to vector<1x1x1x1x288xf32>
    %25 = vector.shape_cast %24 : vector<1x1x1x1x288xf32> to vector<1x1x288xf32>
    %26 = vector.extract_strided_slice %23 {offsets = [0, 1, 0, 0, 0], sizes = [1, 1, 1, 1, 288], strides = [1, 1, 1, 1, 1]} : vector<3x3x1x1x288xf32> to vector<1x1x1x1x288xf32>
    %27 = vector.shape_cast %26 : vector<1x1x1x1x288xf32> to vector<1x1x288xf32>
    %28 = vector.extract_strided_slice %23 {offsets = [0, 2, 0, 0, 0], sizes = [1, 1, 1, 1, 288], strides = [1, 1, 1, 1, 1]} : vector<3x3x1x1x288xf32> to vector<1x1x1x1x288xf32>
    %29 = vector.shape_cast %28 : vector<1x1x1x1x288xf32> to vector<1x1x288xf32>
    %30 = vector.extract_strided_slice %23 {offsets = [1, 0, 0, 0, 0], sizes = [1, 1, 1, 1, 288], strides = [1, 1, 1, 1, 1]} : vector<3x3x1x1x288xf32> to vector<1x1x1x1x288xf32>
    %31 = vector.shape_cast %30 : vector<1x1x1x1x288xf32> to vector<1x1x288xf32>
    %32 = vector.extract_strided_slice %23 {offsets = [1, 1, 0, 0, 0], sizes = [1, 1, 1, 1, 288], strides = [1, 1, 1, 1, 1]} : vector<3x3x1x1x288xf32> to vector<1x1x1x1x288xf32>
    %33 = vector.shape_cast %32 : vector<1x1x1x1x288xf32> to vector<1x1x288xf32>
    %34 = vector.extract_strided_slice %23 {offsets = [1, 2, 0, 0, 0], sizes = [1, 1, 1, 1, 288], strides = [1, 1, 1, 1, 1]} : vector<3x3x1x1x288xf32> to vector<1x1x1x1x288xf32>
    %35 = vector.shape_cast %34 : vector<1x1x1x1x288xf32> to vector<1x1x288xf32>
    %36 = vector.extract_strided_slice %23 {offsets = [2, 0, 0, 0, 0], sizes = [1, 1, 1, 1, 288], strides = [1, 1, 1, 1, 1]} : vector<3x3x1x1x288xf32> to vector<1x1x1x1x288xf32>
    %37 = vector.shape_cast %36 : vector<1x1x1x1x288xf32> to vector<1x1x288xf32>
    %38 = vector.extract_strided_slice %23 {offsets = [2, 1, 0, 0, 0], sizes = [1, 1, 1, 1, 288], strides = [1, 1, 1, 1, 1]} : vector<3x3x1x1x288xf32> to vector<1x1x1x1x288xf32>
    %39 = vector.shape_cast %38 : vector<1x1x1x1x288xf32> to vector<1x1x288xf32>
    %40 = vector.extract_strided_slice %23 {offsets = [2, 2, 0, 0, 0], sizes = [1, 1, 1, 1, 288], strides = [1, 1, 1, 1, 1]} : vector<3x3x1x1x288xf32> to vector<1x1x1x1x288xf32>
    %41 = vector.shape_cast %40 : vector<1x1x1x1x288xf32> to vector<1x1x288xf32>
    %cst_14 = arith.constant 0.000000e+00 : f32
    %42 = vector.broadcast %cst_14 : f32 to vector<8x16x288xf32>
    %43 = vector.extract_strided_slice %19 {offsets = [0, 0, 0], sizes = [8, 16, 288], strides = [1, 1, 1]} : vector<10x16x288xf32> to vector<8x16x288xf32>
    %44 = vector.broadcast %25 : vector<1x1x288xf32> to vector<8x16x288xf32>
    %45 = arith.mulf %43, %44 : vector<8x16x288xf32>
    %46 = arith.addf %42, %45 : vector<8x16x288xf32>
    %47 = vector.extract_strided_slice %16 {offsets = [0, 0, 0], sizes = [8, 16, 288], strides = [1, 1, 1]} : vector<10x16x288xf32> to vector<8x16x288xf32>
    %48 = vector.broadcast %27 : vector<1x1x288xf32> to vector<8x16x288xf32>
    %49 = arith.mulf %47, %48 : vector<8x16x288xf32>
    %50 = arith.addf %46, %49 : vector<8x16x288xf32>
    %51 = vector.extract_strided_slice %21 {offsets = [0, 0, 0], sizes = [8, 16, 288], strides = [1, 1, 1]} : vector<10x16x288xf32> to vector<8x16x288xf32>
    %52 = vector.broadcast %29 : vector<1x1x288xf32> to vector<8x16x288xf32>
    %53 = arith.mulf %51, %52 : vector<8x16x288xf32>
    %54 = arith.addf %50, %53 : vector<8x16x288xf32>
    %55 = vector.extract_strided_slice %19 {offsets = [1, 0, 0], sizes = [8, 16, 288], strides = [1, 1, 1]} : vector<10x16x288xf32> to vector<8x16x288xf32>
    %56 = vector.broadcast %31 : vector<1x1x288xf32> to vector<8x16x288xf32>
    %57 = arith.mulf %55, %56 : vector<8x16x288xf32>
    %58 = arith.addf %54, %57 : vector<8x16x288xf32>
    %59 = vector.extract_strided_slice %16 {offsets = [1, 0, 0], sizes = [8, 16, 288], strides = [1, 1, 1]} : vector<10x16x288xf32> to vector<8x16x288xf32>
    %60 = vector.broadcast %33 : vector<1x1x288xf32> to vector<8x16x288xf32>
    %61 = arith.mulf %59, %60 : vector<8x16x288xf32>
    %62 = arith.addf %58, %61 : vector<8x16x288xf32>
    %63 = vector.extract_strided_slice %21 {offsets = [1, 0, 0], sizes = [8, 16, 288], strides = [1, 1, 1]} : vector<10x16x288xf32> to vector<8x16x288xf32>
    %64 = vector.broadcast %35 : vector<1x1x288xf32> to vector<8x16x288xf32>
    %65 = arith.mulf %63, %64 : vector<8x16x288xf32>
    %66 = arith.addf %62, %65 : vector<8x16x288xf32>
    %67 = vector.extract_strided_slice %19 {offsets = [2, 0, 0], sizes = [8, 16, 288], strides = [1, 1, 1]} : vector<10x16x288xf32> to vector<8x16x288xf32>
    %68 = vector.broadcast %37 : vector<1x1x288xf32> to vector<8x16x288xf32>
    %69 = arith.mulf %67, %68 : vector<8x16x288xf32>
    %70 = arith.addf %66, %69 : vector<8x16x288xf32>
    %71 = vector.extract_strided_slice %16 {offsets = [2, 0, 0], sizes = [8, 16, 288], strides = [1, 1, 1]} : vector<10x16x288xf32> to vector<8x16x288xf32>
    %72 = vector.broadcast %39 : vector<1x1x288xf32> to vector<8x16x288xf32>
    %73 = arith.mulf %71, %72 : vector<8x16x288xf32>
    %74 = arith.addf %70, %73 : vector<8x16x288xf32>
    %75 = vector.extract_strided_slice %21 {offsets = [2, 0, 0], sizes = [8, 16, 288], strides = [1, 1, 1]} : vector<10x16x288xf32> to vector<8x16x288xf32>
    %76 = vector.broadcast %41 : vector<1x1x288xf32> to vector<8x16x288xf32>
    %77 = arith.mulf %75, %76 : vector<8x16x288xf32>
    %78 = arith.addf %74, %77 : vector<8x16x288xf32>
    %79 = vector.shape_cast %78 : vector<8x16x288xf32> to vector<1x8x16x288xf32>
    %c0_15 = arith.constant 0 : index
    %c0_16 = arith.constant 0 : index
    %c0_17 = arith.constant 0 : index
    %c0_18 = arith.constant 0 : index
    %80 = vector.load %arg6[%c0_15, %c0_16, %c0_17, %c0_18] : memref<1x8x16x288xf32, #tpu.memory_space<vmem>>, vector<1x8x16x288xf32>
    tpu.vector_store %arg6[%c0_15, %c0_16, %c0_17, %c0_18], %79 {strides = array<i32>} : memref<1x8x16x288xf32, #tpu.memory_space<vmem>>, vector<1x8x16x288xf32>,
    return
  }
  func.func @transform_0(%arg0: i32, %arg1: i32) -> (i32, i32, i32, i32) {
    %c8_i32 = arith.constant 8 : i32
    %0 = arith.muli %arg1, %c8_i32 : i32
    %c1_i32 = arith.constant 1 : i32
    %1 = arith.subi %0, %c1_i32 : i32
    %c0_i32 = arith.constant 0 : i32
    %2 = arith.maxsi %1, %c0_i32 : i32
    %c0_i32_0 = arith.constant 0 : i32
    %c0_i32_1 = arith.constant 0 : i32
    %c0_i32_2 = arith.constant 0 : i32
    return %arg0, %2, %c0_i32_0, %c0_i32_1 : i32, i32, i32, i32
  }
  func.func @transform_1(%arg0: i32, %arg1: i32) -> (i32, i32, i32, i32) {
    %c0_i32 = arith.constant 0 : i32
    %c0_i32_0 = arith.constant 0 : i32
    %c0_i32_1 = arith.constant 0 : i32
    return %arg0, %arg1, %c0_i32, %c0_i32_0 : i32, i32, i32, i32
  }
  func.func @transform_2(%arg0: i32, %arg1: i32) -> (i32, i32, i32, i32) {
    %c8_i32 = arith.constant 8 : i32
    %0 = arith.muli %arg1, %c8_i32 : i32
    %c8_i32_0 = arith.constant 8 : i32
    %1 = arith.addi %0, %c8_i32_0 : i32
    %c15_i32 = arith.constant 15 : i32
    %2 = arith.minsi %1, %c15_i32 : i32
    %c0_i32 = arith.constant 0 : i32
    %c0_i32_1 = arith.constant 0 : i32
    %c0_i32_2 = arith.constant 0 : i32
    return %arg0, %2, %c0_i32, %c0_i32_1 : i32, i32, i32, i32
  }
  func.func @transform_3(%arg0: i32, %arg1: i32) -> (i32, i32, i32) {
    %c0_i32 = arith.constant 0 : i32
    %c0_i32_0 = arith.constant 0 : i32
    %c0_i32_1 = arith.constant 0 : i32
    %c0_i32_2 = arith.constant 0 : i32
    return %c0_i32, %c0_i32_0, %c0_i32_1 : i32, i32, i32
  }
  func.func @transform_4(%arg0: i32, %arg1: i32) -> (i32, i32, i32, i32) {
    %c0_i32 = arith.constant 0 : i32
    %c0_i32_0 = arith.constant 0 : i32
    %c0_i32_1 = arith.constant 0 : i32
    return %arg0, %arg1, %c0_i32, %c0_i32_0 : i32, i32, i32, i32
  }
}

</mosaic_0001>

<llo_original>
// kernel: tpu_custom_call.1
$region0: #{tpu_custom_call.1}
  #allocation0 [shape = 'u32[]', space=smem, size = 0x4, offset = 0x4, fixed_abs, tag = 'smem constant byte address 0x4 - core index']
  #allocation1 [shape = 'u32[144,128]{1,0:T(1,128)}', space=vmem, size = 0x12000, scoped, tag = 'internal scratch']
  %s0 = inlined_call_operand.hbm [shape: f32[1,16,16,288], index: 0, kind: input, shape index: {}]
  %s1 = inlined_call_operand.hbm [shape: f32[1,16,16,288], index: 1, kind: input, shape index: {}]
  %s2 = inlined_call_operand.hbm [shape: f32[1,16,16,288], index: 2, kind: input, shape index: {}]
  %s3 = inlined_call_operand.hbm [shape: f32[3,3,288], index: 3, kind: input, shape index: {}]
  %s4 = inlined_call_operand.hbm [shape: f32[1,16,16,288], index: 4, kind: output, shape index: {}]
  %s5 = sld [smem:[#allocation0]]
  $region65: #{tpu_custom_call.1} parent=0
    _
  %s7 = ssub.s32 1, %s5
  %s8 = scalar_select 0, %s7, %s5
  $region1: #{tpu_custom_call.1} parent=0
    #allocation2 [shape = 'u8[49152]{0}', space=vmem, size = 0xc000, scoped, tag = 'input window, operand 0']
    #allocation3 [shape = 's32[2]{0}', space=sflag, size = 0x8, scoped, tag = 'scoped memory for tpu_custom_call.1']
    #allocation4 [shape = 's32[2]{0}', space=sflag, size = 0x8, scoped, tag = 'scoped memory for tpu_custom_call.1']
    #allocation5 [shape = 'u8[393216]{0}', space=vmem, size = 0x60000, scoped, tag = 'input window, operand 1']
    #allocation6 [shape = 's32[2]{0}', space=sflag, size = 0x8, scoped, tag = 'scoped memory for tpu_custom_call.1']
    #allocation7 [shape = 'u8[49152]{0}', space=vmem, size = 0xc000, scoped, tag = 'input window, operand 2']
    #allocation8 [shape = 'u8[18432]{0}', space=vmem, size = 0x4800, scoped, tag = 'input window, operand 3, single buffered']
    #allocation9 [shape = 's32[1]{0}', space=sflag, size = 0x4, scoped, tag = 'scoped memory for tpu_custom_call.1']
    #allocation10 [shape = 'u8[393216]{0}', space=vmem, size = 0x60000, scoped, tag = 'output window, operand 0']
    %9 = vsyncpa [#allocation3], 0
    %s10 = scalar_lea.sflag [#allocation3], 1
    %11 = vsyncpa %s10, 0
    %12 = vsyncpa [#allocation6], 0
    %s13 = scalar_lea.sflag [#allocation6], 1
    %14 = vsyncpa %s13, 0
    %15 = vsyncpa [#allocation9], 0
    %16 = vsyncpa [#allocation4], 0
    %s17 = scalar_lea.sflag [#allocation4], 1
    %18 = vsyncpa %s17, 0
    loop: start=0, step=1, limit=4
    $region2: #{tpu_custom_call.1} parent=1 // loop_pre_header
      _
    $region3: #{tpu_custom_call.1} parent=1 // loop_header
      %s20 = sphi 0, %s24
      %p21 = scmp.ge.s32.totalorder %s20, 4
      %s27 = sphi 0, %s39
      %s28 = sphi 0, %s35
      %s29 = sphi 0, %s27
      %s30 = sphi 0, %s28
      %s31 = sphi 0, %s29
      %s32 = sphi 0, %s30
      %s52 = sphi 0, %s54
      %s55 = sphi 0, %s52
      %s56 = sphi 0, %s55
      %s72 = sphi 0, %s56
      %s80 = sphi 0, %s82
      %s83 = sphi 0, %s80
      %s84 = sphi 0, %s83
      %s100 = sphi 0, %s84
      %s116 = sphi 0, %s118
      %s119 = sphi 0, %s116
      %s120 = sphi 0, %s119
      %s136 = sphi 0, %s120
      %s140 = sphi 0, %s140
      %s142 = sphi 0, %s140
      %s143 = sphi 0, %s142
      %s157 = sphi 0, %s143
      %s165 = sphi 0, %s167
      %s168 = sphi 0, %s165
      %s169 = sphi 0, %s168
      %s185 = sphi 0, %s169
    $region4: #{tpu_custom_call.1} parent=1 // loop_header_branch
      %23 = sbr.rel (%p21) target = $region8
    $region5: #{tpu_custom_call.1} parent=1 // loop_body
      %s25 = ssub.s32 %s20, 1
      %s26 = ssub.s32 %s20, 2
      %s33 = sadd.s32 1, %s28
      %p34 = scmp.ge.s32.totalorder %s33, 2
      %s35 = scalar_select %p34, 0, %s33
      %s36 = sadd.s32 1, %s27
      %s37 = scalar_select %p34, %s36, %s27
      %p38 = scmp.ge.s32.totalorder %s37, 1
      %s39 = scalar_select %p38, 0, %s37
      %s40 = smul.u32 %s28, 8
      %s41 = ssub.s32 %s40, 1
      %p42 = scmp.gt.s32.totalorder %s41, 0
      %s43 = scalar_select %p42, %s41, 0
      %s44 = smul.u32 %s35, 8
      %s45 = ssub.s32 %s44, 1
      %p46 = scmp.gt.s32.totalorder %s45, 0
      %s47 = scalar_select %p46, %s45, 0
      %s48 = ssub.s32 %s27, %s39
      %s49 = ssub.s32 %s43, %s47
      %s50 = sor.u32 %s48, %s49
      %p51 = scmp.eq.s32.totalorder %s50, 0
      %s53 = sadd.s32 %s52, 1
      %s54 = scalar_select %p51, %s52, %s53
      %p57 = pneg %p51
      %p58 = scmp.eq.s32.totalorder %s20, 1
      %p59 = por %p57, %p58
      %p60 = scmp.ne.s32.totalorder %s52, %s55
      %p61 = scmp.eq.s32.totalorder %s20, 0
      %p62 = por %p60, %p61
      %p63 = scmp.ne.s32.totalorder %s52, %s55
      %p64 = scmp.eq.s32.totalorder %s25, 1
      %p65 = por %p63, %p64
      %p66 = scmp.ne.s32.totalorder %s55, %s56
      %p67 = scmp.eq.s32.totalorder %s25, 0
      %p68 = por %p66, %p67
      %p69 = scmp.ne.s32.totalorder %s55, %s56
      %p70 = scmp.eq.s32.totalorder %s26, 1
      %p71 = por %p69, %p70
      %p73 = scmp.ne.s32.totalorder %s56, %s72
      %p74 = scmp.eq.s32.totalorder %s26, 0
      %p75 = por %p73, %p74
      %s76 = ssub.s32 %s27, %s39
      %s77 = ssub.s32 %s28, %s35
      %s78 = sor.u32 %s76, %s77
      %p79 = scmp.eq.s32.totalorder %s78, 0
      %s81 = sadd.s32 %s80, 1
      %s82 = scalar_select %p79, %s80, %s81
      %p85 = pneg %p79
      %p86 = scmp.eq.s32.totalorder %s20, 1
      %p87 = por %p85, %p86
      %p88 = scmp.ne.s32.totalorder %s80, %s83
      %p89 = scmp.eq.s32.totalorder %s20, 0
      %p90 = por %p88, %p89
      %p91 = scmp.ne.s32.totalorder %s80, %s83
      %p92 = scmp.eq.s32.totalorder %s25, 1
      %p93 = por %p91, %p92
      %p94 = scmp.ne.s32.totalorder %s83, %s84
      %p95 = scmp.eq.s32.totalorder %s25, 0
      %p96 = por %p94, %p95
      %p97 = scmp.ne.s32.totalorder %s83, %s84
      %p98 = scmp.eq.s32.totalorder %s26, 1
      %p99 = por %p97, %p98
      %p101 = scmp.ne.s32.totalorder %s84, %s100
      %p102 = scmp.eq.s32.totalorder %s26, 0
      %p103 = por %p101, %p102
      %s104 = smul.u32 %s28, 8
      %s105 = sadd.s32 %s104, 8
      %p106 = scmp.lt.s32.totalorder %s105, 15
      %s107 = scalar_select %p106, %s105, 15
      %s108 = smul.u32 %s35, 8
      %s109 = sadd.s32 %s108, 8
      %p110 = scmp.lt.s32.totalorder %s109, 15
      %s111 = scalar_select %p110, %s109, 15
      %s112 = ssub.s32 %s27, %s39
      %s113 = ssub.s32 %s107, %s111
      %s114 = sor.u32 %s112, %s113
      %p115 = scmp.eq.s32.totalorder %s114, 0
      %s117 = sadd.s32 %s116, 1
      %s118 = scalar_select %p115, %s116, %s117
      %p121 = pneg %p115
      %p122 = scmp.eq.s32.totalorder %s20, 1
      %p123 = por %p121, %p122
      %p124 = scmp.ne.s32.totalorder %s116, %s119
      %p125 = scmp.eq.s32.totalorder %s20, 0
      %p126 = por %p124, %p125
      %p127 = scmp.ne.s32.totalorder %s116, %s119
      %p128 = scmp.eq.s32.totalorder %s25, 1
      %p129 = por %p127, %p128
      %p130 = scmp.ne.s32.totalorder %s119, %s120
      %p131 = scmp.eq.s32.totalorder %s25, 0
      %p132 = por %p130, %p131
      %p133 = scmp.ne.s32.totalorder %s119, %s120
      %p134 = scmp.eq.s32.totalorder %s26, 1
      %p135 = por %p133, %p134
      %p137 = scmp.ne.s32.totalorder %s120, %s136
      %p138 = scmp.eq.s32.totalorder %s26, 0
      %p139 = por %p137, %p138
      %s141 = sadd.s32 %s140, 1
      %p144 = scmp.eq.s32.totalorder %s20, 1
      %p145 = scmp.ne.s32.totalorder %s140, %s142
      %p146 = scmp.eq.s32.totalorder %s20, 0
      %p147 = por %p145, %p146
      %p148 = scmp.ne.s32.totalorder %s140, %s142
      %p149 = scmp.eq.s32.totalorder %s25, 1
      %p150 = por %p148, %p149
      %p151 = scmp.ne.s32.totalorder %s142, %s143
      %p152 = scmp.eq.s32.totalorder %s25, 0
      %p153 = por %p151, %p152
      %p154 = scmp.ne.s32.totalorder %s142, %s143
      %p155 = scmp.eq.s32.totalorder %s26, 1
      %p156 = por %p154, %p155
      %p158 = scmp.ne.s32.totalorder %s143, %s157
      %p159 = scmp.eq.s32.totalorder %s26, 0
      %p160 = por %p158, %p159
      %s161 = ssub.s32 %s27, %s39
      %s162 = ssub.s32 %s28, %s35
      %s163 = sor.u32 %s161, %s162
      %p164 = scmp.eq.s32.totalorder %s163, 0
      %s166 = sadd.s32 %s165, 1
      %s167 = scalar_select %p164, %s165, %s166
      %p170 = pneg %p164
      %p171 = scmp.eq.s32.totalorder %s20, 1
      %p172 = por %p170, %p171
      %p173 = scmp.ne.s32.totalorder %s165, %s168
      %p174 = scmp.eq.s32.totalorder %s20, 0
      %p175 = por %p173, %p174
      %p176 = scmp.ne.s32.totalorder %s165, %s168
      %p177 = scmp.eq.s32.totalorder %s25, 1
      %p178 = por %p176, %p177
      %p179 = scmp.ne.s32.totalorder %s168, %s169
      %p180 = scmp.eq.s32.totalorder %s25, 0
      %p181 = por %p179, %p180
      %p182 = scmp.ne.s32.totalorder %s168, %s169
      %p183 = scmp.eq.s32.totalorder %s26, 1
      %p184 = por %p182, %p183
      %p186 = scmp.ne.s32.totalorder %s169, %s185
      %p187 = scmp.eq.s32.totalorder %s26, 0
      %p188 = por %p186, %p187
      %p189 = scmp.le.s32.totalorder 1, %s20
      %p190 = scmp.lt.s32.totalorder %s20, 3
      %p191 = pnand %p189, %p190
      %p192 = pneg %p191
      // Predicated region
      $region9: #{tpu_custom_call.1} parent=5 // pred_check
        _
      $region10: #{tpu_custom_call.1} parent=5 // pred_check_branch
        %194 = sbr.rel (%p191) target = $region12
      $region11: #{tpu_custom_call.1} parent=5 // pred_region
        %s195 = ssub.s32 %s20, 1
        // Predicated region
        $region13: #{tpu_custom_call.1} parent=11 // pred_check
          %p196 = pneg %p153
        $region14: #{tpu_custom_call.1} parent=11 // pred_check_branch
          %198 = sbr.rel (%p196) target = $region16
        $region15: #{tpu_custom_call.1} parent=11 // pred_region
          %s200 = ssub.s32 576, 576
          %201 = vsyncadd [#allocation9], %s200
          %s202 = sshll.u32 [#allocation8], 4
          %s203 = int_to_ptr.vmem [resolvable:$true] %s202
          %208 = dma.hbm_to_vmem [thread:$0]  %s3, 576, %s203, [#allocation9], 192, 192, 12
        $region16: #{tpu_custom_call.1} parent=11 // pred_fallthru
          _
      $region12: #{tpu_custom_call.1} parent=5 // pred_fallthru
        _
      %p209 = scmp.lt.s32.totalorder %s20, 2
      // Predicated region
      $region17: #{tpu_custom_call.1} parent=5 // pred_check
        %p210 = pneg %p209
      $region18: #{tpu_custom_call.1} parent=5 // pred_check_branch
        %212 = sbr.rel (%p210) target = $region20
      $region19: #{tpu_custom_call.1} parent=5 // pred_region
        // Predicated region
        $region21: #{tpu_custom_call.1} parent=19 // pred_check
          %p213 = pneg %p62
        $region22: #{tpu_custom_call.1} parent=19 // pred_check_branch
          %215 = sbr.rel (%p213) target = $region24
        $region23: #{tpu_custom_call.1} parent=19 // pred_region
          %s216 = sand.u32 %s52, 1
          %s217 = scalar_lea.sflag [#allocation3], %s216
          %s218 = sand.u32 %s52, 1
          %s219 = smul.addr %s218, 48
          %s220 = scalar_lea.vmem [#allocation2], %s219
          %s221 = smul.u32 %s28, 8
          %s222 = ssub.s32 %s221, 1
          %p223 = scmp.gt.s32.totalorder %s222, 0
          %s224 = scalar_select %p223, %s222, 0
          %s226 = ssub.s32 768, 768
          %227 = vsyncadd %s217, %s226
          %s228 = smul.addr %s224, 6
          %s229 = smul.addr %s27, 96
          %s230 = sadd.s32 %s228, %s229
          %s231 = smul.addr %s230, 128
          %s232 = scalar_lea.hbm %s0, %s231
          %s233 = sshll.u32 %s220, 4
          %s234 = int_to_ptr.vmem [resolvable:$true] %s233
          %239 = dma.hbm_to_vmem [thread:$0]  %s232, 768, %s234, %s217, 384, 384, 24
        $region24: #{tpu_custom_call.1} parent=19 // pred_fallthru
          _
        // Predicated region
        $region25: #{tpu_custom_call.1} parent=19 // pred_check
          %p240 = pneg %p90
        $region26: #{tpu_custom_call.1} parent=19 // pred_check_branch
          %242 = sbr.rel (%p240) target = $region28
        $region27: #{tpu_custom_call.1} parent=19 // pred_region
          %s243 = sand.u32 %s20, 1
          %s244 = scalar_lea.sflag [#allocation6], %s243
          %s245 = sand.u32 %s80, 1
          %s246 = smul.addr %s245, 384
          %s247 = scalar_lea.vmem [#allocation5], %s246
          %s248 = smul.u32 8, %s28
          %s250 = ssub.s32 6144, 6144
          %251 = vsyncadd %s244, %s250
          %s252 = smul.addr %s248, 6
          %s253 = smul.addr %s27, 96
          %s254 = sadd.s32 %s252, %s253
          %s255 = smul.addr %s254, 128
          %s256 = scalar_lea.hbm %s1, %s255
          %s257 = sshll.u32 %s247, 4
          %s258 = int_to_ptr.vmem [resolvable:$true] %s257
          %263 = dma.hbm_to_vmem [thread:$0]  %s256, 6144, %s258, %s244, 384, 384, 24
        $region28: #{tpu_custom_call.1} parent=19 // pred_fallthru
          _
        // Predicated region
        $region29: #{tpu_custom_call.1} parent=19 // pred_check
          %p264 = pneg %p126
        $region30: #{tpu_custom_call.1} parent=19 // pred_check_branch
          %266 = sbr.rel (%p264) target = $region32
        $region31: #{tpu_custom_call.1} parent=19 // pred_region
          %s267 = sand.u32 %s20, 1
          %s268 = scalar_lea.sflag [#allocation6], %s267
          %s269 = sand.u32 %s116, 1
          %s270 = smul.addr %s269, 48
          %s271 = scalar_lea.vmem [#allocation7], %s270
          %s272 = smul.u32 %s28, 8
          %s273 = sadd.s32 %s272, 8
          %p274 = scmp.lt.s32.totalorder %s273, 15
          %s275 = scalar_select %p274, %s273, 15
          %s277 = ssub.s32 768, 768
          %278 = vsyncadd %s268, %s277
          %s279 = smul.addr %s275, 6
          %s280 = smul.addr %s27, 96
          %s281 = sadd.s32 %s279, %s280
          %s282 = smul.addr %s281, 128
          %s283 = scalar_lea.hbm %s2, %s282
          %s284 = sshll.u32 %s271, 4
          %s285 = int_to_ptr.vmem [resolvable:$true] %s284
          %290 = dma.hbm_to_vmem [thread:$0]  %s283, 768, %s285, %s268, 384, 384, 24
        $region32: #{tpu_custom_call.1} parent=19 // pred_fallthru
          _
      $region20: #{tpu_custom_call.1} parent=5 // pred_fallthru
        _
      %p291 = scmp.le.s32.totalorder 1, %s20
      %p292 = scmp.lt.s32.totalorder %s20, 3
      %p293 = pnand %p291, %p292
      %p294 = pneg %p293
      // Predicated region
      $region33: #{tpu_custom_call.1} parent=5 // pred_check
        _
      $region34: #{tpu_custom_call.1} parent=5 // pred_check_branch
        %296 = sbr.rel (%p293) target = $region36
      $region35: #{tpu_custom_call.1} parent=5 // pred_region
        %s297 = ssub.s32 %s20, 1
        %s298 = sand.u32 %s55, 1
        %s299 = scalar_lea.sflag [#allocation3], %s298
        %s300 = sand.u32 %s55, 1
        %s301 = smul.addr %s300, 48
        %s302 = scalar_lea.vmem [#allocation2], %s301
        // Predicated region
        $region37: #{tpu_custom_call.1} parent=35 // pred_check
          %p303 = pneg %p68
        $region38: #{tpu_custom_call.1} parent=35 // pred_check_branch
          %305 = sbr.rel (%p303) target = $region40
        $region39: #{tpu_custom_call.1} parent=35 // pred_region
          %306 = dma.done %s299, 768
        $region40: #{tpu_custom_call.1} parent=35 // pred_fallthru
          _
        %s307 = sand.u32 %s25, 1
        %s308 = scalar_lea.sflag [#allocation6], %s307
        %s309 = sand.u32 %s83, 1
        %s310 = smul.addr %s309, 384
        %s311 = scalar_lea.vmem [#allocation5], %s310
        // Predicated region
        $region41: #{tpu_custom_call.1} parent=35 // pred_check
          %p312 = pneg %p96
        $region42: #{tpu_custom_call.1} parent=35 // pred_check_branch
          %314 = sbr.rel (%p312) target = $region44
        $region43: #{tpu_custom_call.1} parent=35 // pred_region
          %315 = dma.done %s308, 6144
        $region44: #{tpu_custom_call.1} parent=35 // pred_fallthru
          _
        %s316 = sand.u32 %s25, 1
        %s317 = scalar_lea.sflag [#allocation6], %s316
        %s318 = sand.u32 %s119, 1
        %s319 = smul.addr %s318, 48
        %s320 = scalar_lea.vmem [#allocation7], %s319
        // Predicated region
        $region45: #{tpu_custom_call.1} parent=35 // pred_check
          %p321 = pneg %p132
        $region46: #{tpu_custom_call.1} parent=35 // pred_check_branch
          %323 = sbr.rel (%p321) target = $region48
        $region47: #{tpu_custom_call.1} parent=35 // pred_region
          %324 = dma.done %s317, 768
        $region48: #{tpu_custom_call.1} parent=35 // pred_fallthru
          _
        // Predicated region
        $region49: #{tpu_custom_call.1} parent=35 // pred_check
          %p325 = pneg %p153
        $region50: #{tpu_custom_call.1} parent=35 // pred_check_branch
          %327 = sbr.rel (%p325) target = $region52
        $region51: #{tpu_custom_call.1} parent=35 // pred_region
          %328 = dma.done [#allocation9], 576
        $region52: #{tpu_custom_call.1} parent=35 // pred_fallthru
          _
        %s329 = sand.u32 %s55, 1
        %s330 = scalar_lea.sflag [#allocation3], %s329
        %s331 = sand.u32 %s55, 1
        %s332 = smul.addr %s331, 48
        %s333 = scalar_lea.vmem [#allocation2], %s332
        %p334 = pneg %p68
        %p335 = pneg %p65
        %s336 = sand.u32 %s25, 1
        %s337 = scalar_lea.sflag [#allocation6], %s336
        %s338 = sand.u32 %s83, 1
        %s339 = smul.addr %s338, 384
        %s340 = scalar_lea.vmem [#allocation5], %s339
        %p341 = pneg %p96
        %p342 = pneg %p93
        %s343 = sand.u32 %s25, 1
        %s344 = scalar_lea.sflag [#allocation6], %s343
        %s345 = sand.u32 %s119, 1
        %s346 = smul.addr %s345, 48
        %s347 = scalar_lea.vmem [#allocation7], %s346
        %p348 = pneg %p132
        %p349 = pneg %p129
        %p350 = pneg %p153
        %p351 = pneg %p150
        %p352 = pneg %p181
        %p353 = pneg %p178
        %s354 = sand.u32 %s168, 1
        %s355 = scalar_lea.sflag [#allocation4], %s354
        %s356 = sand.u32 %s168, 1
        %s357 = smul.addr %s356, 384
        %s358 = scalar_lea.vmem [#allocation10], %s357
        %s359 = smul.u32 %s30, 8
        %s360 = ssub.s32 %s359, 1
        %p361 = scmp.gt.s32.totalorder %s360, 0
        %s362 = scalar_select %p361, %s360, 0
        %s363 = smul.u32 8, %s30
        %s364 = smul.u32 %s30, 8
        %s365 = sadd.s32 %s364, 8
        %p366 = scmp.lt.s32.totalorder %s365, 15
        %s367 = scalar_select %p366, %s365, 15
        %s368 = smul.u32 8, %s30
        %v369 = vld [vmem:[%s302] sm:$0xff]
        %v370 = vld [vmem:[%s302 + $0x8] sm:$0xff]
        %v371 = vld [vmem:[%s302 + $0x10] sm:$0xff]
        %v372 = vld [vmem:[%s302 + $0x18] sm:$0xff]
        %v373 = vld [vmem:[%s302 + $0x20] sm:$0xff]
        %v374 = vld [vmem:[%s302 + $0x28] sm:$0xff]
        %p375 = scmp.gt.s32.totalorder %s30, 0
        %s376 = scalar_select %p375, 1, 0
        %s377 = scvt.s32.f32 %s376
        %v378 = vstv %s377
        %v379 = vmul.f32 %v369, %v378
        %v380 = vmul.f32 %v370, %v378
        %v381 = vmul.f32 %v371, %v378
        %v382 = vmul.f32 %v372, %v378
        %v383 = vmul.f32 %v373, %v378
        %v384 = vmul.f32 %v374, %v378
        %v385 = vld [vmem:[%s320] sm:$0xff]
        %v386 = vld [vmem:[%s320 + $0x8] sm:$0xff]
        %v387 = vld [vmem:[%s320 + $0x10] sm:$0xff]
        %v388 = vld [vmem:[%s320 + $0x18] sm:$0xff]
        %v389 = vld [vmem:[%s320 + $0x20] sm:$0xff]
        %v390 = vld [vmem:[%s320 + $0x28] sm:$0xff]
        %p391 = scmp.lt.s32.totalorder %s30, 1
        %s392 = scalar_select %p391, 1, 0
        %s393 = scvt.s32.f32 %s392
        %v394 = vstv %s393
        %v395 = vmul.f32 %v385, %v394
        %v396 = vmul.f32 %v386, %v394
        %v397 = vmul.f32 %v387, %v394
        %v398 = vmul.f32 %v388, %v394
        %v399 = vmul.f32 %v389, %v394
        %v400 = vmul.f32 %v390, %v394
        %v401 = vld [vmem:[%s311] sm:$0xff]
        %v402 = vld [vmem:[%s311 + $0x8] sm:$0xff]
        %v403 = vld [vmem:[%s311 + $0x10] sm:$0xff]
        %v404 = vld [vmem:[%s311 + $0x18] sm:$0xff]
        %v405 = vld [vmem:[%s311 + $0x20] sm:$0xff]
        %v406 = vld [vmem:[%s311 + $0x28] sm:$0xff]
        %v407 = vld [vmem:[%s311 + $0x30] sm:$0xff]
        %v408 = vld [vmem:[%s311 + $0x38] sm:$0xff]
        %v409 = vld [vmem:[%s311 + $0x40] sm:$0xff]
        %v410 = vld [vmem:[%s311 + $0x48] sm:$0xff]
        %v411 = vld [vmem:[%s311 + $0x50] sm:$0xff]
        %v412 = vld [vmem:[%s311 + $0x58] sm:$0xff]
        %v413 = vld [vmem:[%s311 + $0x60] sm:$0xff]
        %v414 = vld [vmem:[%s311 + $0x68] sm:$0xff]
        %v415 = vld [vmem:[%s311 + $0x70] sm:$0xff]
        %v416 = vld [vmem:[%s311 + $0x78] sm:$0xff]
        %v417 = vld [vmem:[%s311 + $0x80] sm:$0xff]
        %v418 = vld [vmem:[%s311 + $0x88] sm:$0xff]
        %v419 = vld [vmem:[%s311 + $0x90] sm:$0xff]
        %v420 = vld [vmem:[%s311 + $0x98] sm:$0xff]
        %v421 = vld [vmem:[%s311 + $0xa0] sm:$0xff]
        %v422 = vld [vmem:[%s311 + $0xa8] sm:$0xff]
        %v423 = vld [vmem:[%s311 + $0xb0] sm:$0xff]
        %v424 = vld [vmem:[%s311 + $0xb8] sm:$0xff]
        %v425 = vld [vmem:[%s311 + $0xc0] sm:$0xff]
        %v426 = vld [vmem:[%s311 + $0xc8] sm:$0xff]
        %v427 = vld [vmem:[%s311 + $0xd0] sm:$0xff]
        %v428 = vld [vmem:[%s311 + $0xd8] sm:$0xff]
        %v429 = vld [vmem:[%s311 + $0xe0] sm:$0xff]
        %v430 = vld [vmem:[%s311 + $0xe8] sm:$0xff]
        %v431 = vld [vmem:[%s311 + $0xf0] sm:$0xff]
        %v432 = vld [vmem:[%s311 + $0xf8] sm:$0xff]
        %v433 = vld [vmem:[%s311 + $0x100] sm:$0xff]
        %v434 = vld [vmem:[%s311 + $0x108] sm:$0xff]
        %v435 = vld [vmem:[%s311 + $0x110] sm:$0xff]
        %v436 = vld [vmem:[%s311 + $0x118] sm:$0xff]
        %v437 = vld [vmem:[%s311 + $0x120] sm:$0xff]
        %v438 = vld [vmem:[%s311 + $0x128] sm:$0xff]
        %v439 = vld [vmem:[%s311 + $0x130] sm:$0xff]
        %v440 = vld [vmem:[%s311 + $0x138] sm:$0xff]
        %v441 = vld [vmem:[%s311 + $0x140] sm:$0xff]
        %v442 = vld [vmem:[%s311 + $0x148] sm:$0xff]
        %v443 = vld [vmem:[%s311 + $0x150] sm:$0xff]
        %v444 = vld [vmem:[%s311 + $0x158] sm:$0xff]
        %v445 = vld [vmem:[%s311 + $0x160] sm:$0xff]
        %v446 = vld [vmem:[%s311 + $0x168] sm:$0xff]
        %v447 = vld [vmem:[%s311 + $0x170] sm:$0xff]
        %v448 = vld [vmem:[%s311 + $0x178] sm:$0xff]
        %vm509 = vcmask 1040384
        %v510 = vrot.slane %v379, 7
        %v511 = vrot.slane %v380, 7
        %v512 = vrot.slane %v381, 7
        %v513 = vrot.slane %v382, 7
        %v514 = vsel %vm509, %v510, %v513
        %v515 = vrot.slane %v383, 7
        %v516 = vsel %vm509, %v511, %v515
        %v517 = vrot.slane %v384, 7
        %v518 = vsel %vm509, %v512, %v517
        %v519 = vrot.slane %v401, 7
        %v520 = vrot.slane %v402, 7
        %v521 = vrot.slane %v403, 7
        %v522 = vrot.slane %v404, 7
        %v523 = vsel %vm509, %v519, %v522
        %v524 = vrot.slane %v405, 7
        %v525 = vsel %vm509, %v520, %v524
        %v526 = vrot.slane %v406, 7
        %v527 = vsel %vm509, %v521, %v526
        %v528 = vrot.slane %v407, 7
        %v529 = vrot.slane %v408, 7
        %v530 = vrot.slane %v409, 7
        %v531 = vrot.slane %v410, 7
        %v532 = vsel %vm509, %v528, %v531
        %v533 = vrot.slane %v411, 7
        %v534 = vsel %vm509, %v529, %v533
        %v535 = vrot.slane %v412, 7
        %v536 = vsel %vm509, %v530, %v535
        %v537 = vrot.slane %v413, 7
        %v538 = vrot.slane %v414, 7
        %v539 = vrot.slane %v415, 7
        %v540 = vrot.slane %v416, 7
        %v541 = vsel %vm509, %v537, %v540
        %v542 = vrot.slane %v417, 7
        %v543 = vsel %vm509, %v538, %v542
        %v544 = vrot.slane %v418, 7
        %v545 = vsel %vm509, %v539, %v544
        %v546 = vrot.slane %v419, 7
        %v547 = vrot.slane %v420, 7
        %v548 = vrot.slane %v421, 7
        %v549 = vrot.slane %v422, 7
        %v550 = vsel %vm509, %v546, %v549
        %v551 = vrot.slane %v423, 7
        %v552 = vsel %vm509, %v547, %v551
        %v553 = vrot.slane %v424, 7
        %v554 = vsel %vm509, %v548, %v553
        %v555 = vrot.slane %v425, 7
        %v556 = vrot.slane %v426, 7
        %v557 = vrot.slane %v427, 7
        %v558 = vrot.slane %v428, 7
        %v559 = vsel %vm509, %v555, %v558
        %v560 = vrot.slane %v429, 7
        %v561 = vsel %vm509, %v556, %v560
        %v562 = vrot.slane %v430, 7
        %v563 = vsel %vm509, %v557, %v562
        %v564 = vrot.slane %v431, 7
        %v565 = vrot.slane %v432, 7
        %v566 = vrot.slane %v433, 7
        %v567 = vrot.slane %v434, 7
        %v568 = vsel %vm509, %v564, %v567
        %v569 = vrot.slane %v435, 7
        %v570 = vsel %vm509, %v565, %v569
        %v571 = vrot.slane %v436, 7
        %v572 = vsel %vm509, %v566, %v571
        %v573 = vrot.slane %v437, 7
        %v574 = vrot.slane %v438, 7
        %v575 = vrot.slane %v439, 7
        %v576 = vrot.slane %v440, 7
        %v577 = vsel %vm509, %v573, %v576
        %v578 = vrot.slane %v441, 7
        %v579 = vsel %vm509, %v574, %v578
        %v580 = vrot.slane %v442, 7
        %v581 = vsel %vm509, %v575, %v580
        %v582 = vrot.slane %v443, 7
        %v583 = vrot.slane %v444, 7
        %v584 = vrot.slane %v445, 7
        %v585 = vrot.slane %v446, 7
        %v586 = vsel %vm509, %v582, %v585
        %v587 = vrot.slane %v447, 7
        %v588 = vsel %vm509, %v583, %v587
        %v589 = vrot.slane %v448, 7
        %v590 = vsel %vm509, %v584, %v589
        %v591 = vrot.slane %v395, 7
        %v592 = vrot.slane %v396, 7
        %v593 = vrot.slane %v397, 7
        %v594 = vrot.slane %v398, 7
        %v595 = vsel %vm509, %v591, %v594
        %v596 = vrot.slane %v399, 7
        %v597 = vsel %vm509, %v592, %v596
        %v598 = vrot.slane %v400, 7
        %v599 = vsel %vm509, %v593, %v598
        %v660 = vsel %vm509, 0.0, %v510
        %v661 = vsel %vm509, 0.0, %v511
        %v662 = vsel %vm509, 0.0, %v512
        %v663 = vsel %vm509, 0.0, %v519
        %v664 = vsel %vm509, 0.0, %v520
        %v665 = vsel %vm509, 0.0, %v521
        %v666 = vsel %vm509, 0.0, %v528
        %v667 = vsel %vm509, 0.0, %v529
        %v668 = vsel %vm509, 0.0, %v530
        %v669 = vsel %vm509, 0.0, %v537
        %v670 = vsel %vm509, 0.0, %v538
        %v671 = vsel %vm509, 0.0, %v539
        %v672 = vsel %vm509, 0.0, %v546
        %v673 = vsel %vm509, 0.0, %v547
        %v674 = vsel %vm509, 0.0, %v548
        %v675 = vsel %vm509, 0.0, %v555
        %v676 = vsel %vm509, 0.0, %v556
        %v677 = vsel %vm509, 0.0, %v557
        %v678 = vsel %vm509, 0.0, %v564
        %v679 = vsel %vm509, 0.0, %v565
        %v680 = vsel %vm509, 0.0, %v566
        %v681 = vsel %vm509, 0.0, %v573
        %v682 = vsel %vm509, 0.0, %v574
        %v683 = vsel %vm509, 0.0, %v575
        %v684 = vsel %vm509, 0.0, %v582
        %v685 = vsel %vm509, 0.0, %v583
        %v686 = vsel %vm509, 0.0, %v584
        %v687 = vsel %vm509, 0.0, %v591
        %v688 = vsel %vm509, 0.0, %v592
        %v689 = vsel %vm509, 0.0, %v593
        %vm690 = vcmask 1046528
        %v691 = vrot.slane %v379, 1
        %v692 = vrot.slane %v382, 1
        %v693 = vsel %vm690, %v691, %v692
        %v694 = vrot.slane %v380, 1
        %v695 = vrot.slane %v383, 1
        %v696 = vsel %vm690, %v694, %v695
        %v697 = vrot.slane %v381, 1
        %v698 = vrot.slane %v384, 1
        %v699 = vsel %vm690, %v697, %v698
        %v700 = vrot.slane %v401, 1
        %v701 = vrot.slane %v404, 1
        %v702 = vsel %vm690, %v700, %v701
        %v703 = vrot.slane %v402, 1
        %v704 = vrot.slane %v405, 1
        %v705 = vsel %vm690, %v703, %v704
        %v706 = vrot.slane %v403, 1
        %v707 = vrot.slane %v406, 1
        %v708 = vsel %vm690, %v706, %v707
        %v709 = vrot.slane %v407, 1
        %v710 = vrot.slane %v410, 1
        %v711 = vsel %vm690, %v709, %v710
        %v712 = vrot.slane %v408, 1
        %v713 = vrot.slane %v411, 1
        %v714 = vsel %vm690, %v712, %v713
        %v715 = vrot.slane %v409, 1
        %v716 = vrot.slane %v412, 1
        %v717 = vsel %vm690, %v715, %v716
        %v718 = vrot.slane %v413, 1
        %v719 = vrot.slane %v416, 1
        %v720 = vsel %vm690, %v718, %v719
        %v721 = vrot.slane %v414, 1
        %v722 = vrot.slane %v417, 1
        %v723 = vsel %vm690, %v721, %v722
        %v724 = vrot.slane %v415, 1
        %v725 = vrot.slane %v418, 1
        %v726 = vsel %vm690, %v724, %v725
        %v727 = vrot.slane %v419, 1
        %v728 = vrot.slane %v422, 1
        %v729 = vsel %vm690, %v727, %v728
        %v730 = vrot.slane %v420, 1
        %v731 = vrot.slane %v423, 1
        %v732 = vsel %vm690, %v730, %v731
        %v733 = vrot.slane %v421, 1
        %v734 = vrot.slane %v424, 1
        %v735 = vsel %vm690, %v733, %v734
        %v736 = vrot.slane %v425, 1
        %v737 = vrot.slane %v428, 1
        %v738 = vsel %vm690, %v736, %v737
        %v739 = vrot.slane %v426, 1
        %v740 = vrot.slane %v429, 1
        %v741 = vsel %vm690, %v739, %v740
        %v742 = vrot.slane %v427, 1
        %v743 = vrot.slane %v430, 1
        %v744 = vsel %vm690, %v742, %v743
        %v745 = vrot.slane %v431, 1
        %v746 = vrot.slane %v434, 1
        %v747 = vsel %vm690, %v745, %v746
        %v748 = vrot.slane %v432, 1
        %v749 = vrot.slane %v435, 1
        %v750 = vsel %vm690, %v748, %v749
        %v751 = vrot.slane %v433, 1
        %v752 = vrot.slane %v436, 1
        %v753 = vsel %vm690, %v751, %v752
        %v754 = vrot.slane %v437, 1
        %v755 = vrot.slane %v440, 1
        %v756 = vsel %vm690, %v754, %v755
        %v757 = vrot.slane %v438, 1
        %v758 = vrot.slane %v441, 1
        %v759 = vsel %vm690, %v757, %v758
        %v760 = vrot.slane %v439, 1
        %v761 = vrot.slane %v442, 1
        %v762 = vsel %vm690, %v760, %v761
        %v763 = vrot.slane %v443, 1
        %v764 = vrot.slane %v446, 1
        %v765 = vsel %vm690, %v763, %v764
        %v766 = vrot.slane %v444, 1
        %v767 = vrot.slane %v447, 1
        %v768 = vsel %vm690, %v766, %v767
        %v769 = vrot.slane %v445, 1
        %v770 = vrot.slane %v448, 1
        %v771 = vsel %vm690, %v769, %v770
        %v772 = vrot.slane %v395, 1
        %v773 = vrot.slane %v398, 1
        %v774 = vsel %vm690, %v772, %v773
        %v775 = vrot.slane %v396, 1
        %v776 = vrot.slane %v399, 1
        %v777 = vsel %vm690, %v775, %v776
        %v778 = vrot.slane %v397, 1
        %v779 = vrot.slane %v400, 1
        %v780 = vsel %vm690, %v778, %v779
        %v841 = vsel %vm690, %v692, 0.0
        %v842 = vsel %vm690, %v695, 0.0
        %v843 = vsel %vm690, %v698, 0.0
        %v844 = vsel %vm690, %v701, 0.0
        %v845 = vsel %vm690, %v704, 0.0
        %v846 = vsel %vm690, %v707, 0.0
        %v847 = vsel %vm690, %v710, 0.0
        %v848 = vsel %vm690, %v713, 0.0
        %v849 = vsel %vm690, %v716, 0.0
        %v850 = vsel %vm690, %v719, 0.0
        %v851 = vsel %vm690, %v722, 0.0
        %v852 = vsel %vm690, %v725, 0.0
        %v853 = vsel %vm690, %v728, 0.0
        %v854 = vsel %vm690, %v731, 0.0
        %v855 = vsel %vm690, %v734, 0.0
        %v856 = vsel %vm690, %v737, 0.0
        %v857 = vsel %vm690, %v740, 0.0
        %v858 = vsel %vm690, %v743, 0.0
        %v859 = vsel %vm690, %v746, 0.0
        %v860 = vsel %vm690, %v749, 0.0
        %v861 = vsel %vm690, %v752, 0.0
        %v862 = vsel %vm690, %v755, 0.0
        %v863 = vsel %vm690, %v758, 0.0
        %v864 = vsel %vm690, %v761, 0.0
        %v865 = vsel %vm690, %v764, 0.0
        %v866 = vsel %vm690, %v767, 0.0
        %v867 = vsel %vm690, %v770, 0.0
        %v868 = vsel %vm690, %v773, 0.0
        %v869 = vsel %vm690, %v776, 0.0
        %v870 = vsel %vm690, %v779, 0.0
        %v871 = vld [vmem:[#allocation8] sm:$0x77]
        %v872 = vld [vmem:[#allocation8 + $0x8] sm:$0x7]
        %v873 = vld [vmem:[#allocation8 + $0xc] sm:$0x77]
        %v874 = vld [vmem:[#allocation8 + $0x14] sm:$0x7]
        %v875 = vld [vmem:[#allocation8 + $0x18] sm:$0x77]
        %v876 = vld [vmem:[#allocation8 + $0x20] sm:$0x7]
        %v879 = vlaneseq
        %v880 = vshrl.u32 %v879, 7
        %v881 = vsub.s32 0, %v880
        %v882 = vrot.slane %v871, %v881
        %v883 = vlaneseq
        %v884 = vshrl.u32 %v883, 7
        %v885 = vsub.s32 4, %v884
        %v886 = vrot.slane %v871, %v885
        %v887 = vlaneseq
        %v888 = vshrl.u32 %v887, 7
        %v889 = vsub.s32 0, %v888
        %v890 = vrot.slane %v872, %v889
        %v894 = vlaneseq
        %v895 = vshrl.u32 %v894, 7
        %v896 = vsub.s32 0, %v895
        %v897 = vrot.slane %v882, %v896
        %v898 = vlaneseq
        %v899 = vshrl.u32 %v898, 7
        %v900 = vsub.s32 0, %v899
        %v901 = vrot.slane %v886, %v900
        %v902 = vlaneseq
        %v903 = vshrl.u32 %v902, 7
        %v904 = vsub.s32 0, %v903
        %v905 = vrot.slane %v890, %v904
        %v906 = vmul.f32 %v660, %v897
        %v907 = vmul.f32 %v661, %v901
        %v908 = vmul.f32 %v662, %v905
        %v909 = vmul.f32 %v514, %v897
        %v910 = vmul.f32 %v516, %v901
        %v911 = vmul.f32 %v518, %v905
        %v912 = vmul.f32 %v663, %v897
        %v913 = vmul.f32 %v664, %v901
        %v914 = vmul.f32 %v665, %v905
        %v915 = vmul.f32 %v523, %v897
        %v916 = vmul.f32 %v525, %v901
        %v917 = vmul.f32 %v527, %v905
        %v918 = vmul.f32 %v666, %v897
        %v919 = vmul.f32 %v667, %v901
        %v920 = vmul.f32 %v668, %v905
        %v921 = vmul.f32 %v532, %v897
        %v922 = vmul.f32 %v534, %v901
        %v923 = vmul.f32 %v536, %v905
        %v924 = vmul.f32 %v669, %v897
        %v925 = vmul.f32 %v670, %v901
        %v926 = vmul.f32 %v671, %v905
        %v927 = vmul.f32 %v541, %v897
        %v928 = vmul.f32 %v543, %v901
        %v929 = vmul.f32 %v545, %v905
        %v930 = vmul.f32 %v672, %v897
        %v931 = vmul.f32 %v673, %v901
        %v932 = vmul.f32 %v674, %v905
        %v933 = vmul.f32 %v550, %v897
        %v934 = vmul.f32 %v552, %v901
        %v935 = vmul.f32 %v554, %v905
        %v936 = vmul.f32 %v675, %v897
        %v937 = vmul.f32 %v676, %v901
        %v938 = vmul.f32 %v677, %v905
        %v939 = vmul.f32 %v559, %v897
        %v940 = vmul.f32 %v561, %v901
        %v941 = vmul.f32 %v563, %v905
        %v942 = vmul.f32 %v678, %v897
        %v943 = vmul.f32 %v679, %v901
        %v944 = vmul.f32 %v680, %v905
        %v945 = vmul.f32 %v568, %v897
        %v946 = vmul.f32 %v570, %v901
        %v947 = vmul.f32 %v572, %v905
        %v948 = vmul.f32 %v681, %v897
        %v949 = vmul.f32 %v682, %v901
        %v950 = vmul.f32 %v683, %v905
        %v951 = vmul.f32 %v577, %v897
        %v952 = vmul.f32 %v579, %v901
        %v953 = vmul.f32 %v581, %v905
        %v954 = vadd.f32 %v906, 0.0
        %v955 = vadd.f32 %v907, 0.0
        %v956 = vadd.f32 %v908, 0.0
        %v957 = vadd.f32 %v909, 0.0
        %v958 = vadd.f32 %v910, 0.0
        %v959 = vadd.f32 %v911, 0.0
        %v960 = vadd.f32 %v912, 0.0
        %v961 = vadd.f32 %v913, 0.0
        %v962 = vadd.f32 %v914, 0.0
        %v963 = vadd.f32 %v915, 0.0
        %v964 = vadd.f32 %v916, 0.0
        %v965 = vadd.f32 %v917, 0.0
        %v966 = vadd.f32 %v918, 0.0
        %v967 = vadd.f32 %v919, 0.0
        %v968 = vadd.f32 %v920, 0.0
        %v969 = vadd.f32 %v921, 0.0
        %v970 = vadd.f32 %v922, 0.0
        %v971 = vadd.f32 %v923, 0.0
        %v972 = vadd.f32 %v924, 0.0
        %v973 = vadd.f32 %v925, 0.0
        %v974 = vadd.f32 %v926, 0.0
        %v975 = vadd.f32 %v927, 0.0
        %v976 = vadd.f32 %v928, 0.0
        %v977 = vadd.f32 %v929, 0.0
        %v978 = vadd.f32 %v930, 0.0
        %v979 = vadd.f32 %v931, 0.0
        %v980 = vadd.f32 %v932, 0.0
        %v981 = vadd.f32 %v933, 0.0
        %v982 = vadd.f32 %v934, 0.0
        %v983 = vadd.f32 %v935, 0.0
        %v984 = vadd.f32 %v936, 0.0
        %v985 = vadd.f32 %v937, 0.0
        %v986 = vadd.f32 %v938, 0.0
        %v987 = vadd.f32 %v939, 0.0
        %v988 = vadd.f32 %v940, 0.0
        %v989 = vadd.f32 %v941, 0.0
        %v990 = vadd.f32 %v942, 0.0
        %v991 = vadd.f32 %v943, 0.0
        %v992 = vadd.f32 %v944, 0.0
        %v993 = vadd.f32 %v945, 0.0
        %v994 = vadd.f32 %v946, 0.0
        %v995 = vadd.f32 %v947, 0.0
        %v996 = vadd.f32 %v948, 0.0
        %v997 = vadd.f32 %v949, 0.0
        %v998 = vadd.f32 %v950, 0.0
        %v999 = vadd.f32 %v951, 0.0
        %v1000 = vadd.f32 %v952, 0.0
        %v1001 = vadd.f32 %v953, 0.0
        %v1002 = vlaneseq
        %v1003 = vshrl.u32 %v1002, 7
        %v1004 = vsub.s32 1, %v1003
        %v1005 = vrot.slane %v871, %v1004
        %v1006 = vlaneseq
        %v1007 = vshrl.u32 %v1006, 7
        %v1008 = vsub.s32 5, %v1007
        %v1009 = vrot.slane %v871, %v1008
        %v1010 = vlaneseq
        %v1011 = vshrl.u32 %v1010, 7
        %v1012 = vsub.s32 1, %v1011
        %v1013 = vrot.slane %v872, %v1012
        %v1017 = vlaneseq
        %v1018 = vshrl.u32 %v1017, 7
        %v1019 = vsub.s32 1, %v1018
        %v1020 = vrot.slane %v1005, %v1019
        %v1021 = vlaneseq
        %v1022 = vshrl.u32 %v1021, 7
        %v1023 = vsub.s32 1, %v1022
        %v1024 = vrot.slane %v1009, %v1023
        %v1025 = vlaneseq
        %v1026 = vshrl.u32 %v1025, 7
        %v1027 = vsub.s32 1, %v1026
        %v1028 = vrot.slane %v1013, %v1027
        %v1029 = vmul.f32 %v379, %v1020
        %v1030 = vmul.f32 %v380, %v1024
        %v1031 = vmul.f32 %v381, %v1028
        %v1032 = vmul.f32 %v382, %v1020
        %v1033 = vmul.f32 %v383, %v1024
        %v1034 = vmul.f32 %v384, %v1028
        %v1035 = vmul.f32 %v401, %v1020
        %v1036 = vmul.f32 %v402, %v1024
        %v1037 = vmul.f32 %v403, %v1028
        %v1038 = vmul.f32 %v404, %v1020
        %v1039 = vmul.f32 %v405, %v1024
        %v1040 = vmul.f32 %v406, %v1028
        %v1041 = vmul.f32 %v407, %v1020
        %v1042 = vmul.f32 %v408, %v1024
        %v1043 = vmul.f32 %v409, %v1028
        %v1044 = vmul.f32 %v410, %v1020
        %v1045 = vmul.f32 %v411, %v1024
        %v1046 = vmul.f32 %v412, %v1028
        %v1047 = vmul.f32 %v413, %v1020
        %v1048 = vmul.f32 %v414, %v1024
        %v1049 = vmul.f32 %v415, %v1028
        %v1050 = vmul.f32 %v416, %v1020
        %v1051 = vmul.f32 %v417, %v1024
        %v1052 = vmul.f32 %v418, %v1028
        %v1053 = vmul.f32 %v419, %v1020
        %v1054 = vmul.f32 %v420, %v1024
        %v1055 = vmul.f32 %v421, %v1028
        %v1056 = vmul.f32 %v422, %v1020
        %v1057 = vmul.f32 %v423, %v1024
        %v1058 = vmul.f32 %v424, %v1028
        %v1059 = vmul.f32 %v425, %v1020
        %v1060 = vmul.f32 %v426, %v1024
        %v1061 = vmul.f32 %v427, %v1028
        %v1062 = vmul.f32 %v428, %v1020
        %v1063 = vmul.f32 %v429, %v1024
        %v1064 = vmul.f32 %v430, %v1028
        %v1065 = vmul.f32 %v431, %v1020
        %v1066 = vmul.f32 %v432, %v1024
        %v1067 = vmul.f32 %v433, %v1028
        %v1068 = vmul.f32 %v434, %v1020
        %v1069 = vmul.f32 %v435, %v1024
        %v1070 = vmul.f32 %v436, %v1028
        %v1071 = vmul.f32 %v437, %v1020
        %v1072 = vmul.f32 %v438, %v1024
        %v1073 = vmul.f32 %v439, %v1028
        %v1074 = vmul.f32 %v440, %v1020
        %v1075 = vmul.f32 %v441, %v1024
        %v1076 = vmul.f32 %v442, %v1028
        %v1077 = vadd.f32 %v954, %v1029
        %v1078 = vadd.f32 %v955, %v1030
        %v1079 = vadd.f32 %v956, %v1031
        %v1080 = vadd.f32 %v957, %v1032
        %v1081 = vadd.f32 %v958, %v1033
        %v1082 = vadd.f32 %v959, %v1034
        %v1083 = vadd.f32 %v960, %v1035
        %v1084 = vadd.f32 %v961, %v1036
        %v1085 = vadd.f32 %v962, %v1037
        %v1086 = vadd.f32 %v963, %v1038
        %v1087 = vadd.f32 %v964, %v1039
        %v1088 = vadd.f32 %v965, %v1040
        %v1089 = vadd.f32 %v966, %v1041
        %v1090 = vadd.f32 %v967, %v1042
        %v1091 = vadd.f32 %v968, %v1043
        %v1092 = vadd.f32 %v969, %v1044
        %v1093 = vadd.f32 %v970, %v1045
        %v1094 = vadd.f32 %v971, %v1046
        %v1095 = vadd.f32 %v972, %v1047
        %v1096 = vadd.f32 %v973, %v1048
        %v1097 = vadd.f32 %v974, %v1049
        %v1098 = vadd.f32 %v975, %v1050
        %v1099 = vadd.f32 %v976, %v1051
        %v1100 = vadd.f32 %v977, %v1052
        %v1101 = vadd.f32 %v978, %v1053
        %v1102 = vadd.f32 %v979, %v1054
        %v1103 = vadd.f32 %v980, %v1055
        %v1104 = vadd.f32 %v981, %v1056
        %v1105 = vadd.f32 %v982, %v1057
        %v1106 = vadd.f32 %v983, %v1058
        %v1107 = vadd.f32 %v984, %v1059
        %v1108 = vadd.f32 %v985, %v1060
        %v1109 = vadd.f32 %v986, %v1061
        %v1110 = vadd.f32 %v987, %v1062
        %v1111 = vadd.f32 %v988, %v1063
        %v1112 = vadd.f32 %v989, %v1064
        %v1113 = vadd.f32 %v990, %v1065
        %v1114 = vadd.f32 %v991, %v1066
        %v1115 = vadd.f32 %v992, %v1067
        %v1116 = vadd.f32 %v993, %v1068
        %v1117 = vadd.f32 %v994, %v1069
        %v1118 = vadd.f32 %v995, %v1070
        %v1119 = vadd.f32 %v996, %v1071
        %v1120 = vadd.f32 %v997, %v1072
        %v1121 = vadd.f32 %v998, %v1073
        %v1122 = vadd.f32 %v999, %v1074
        %v1123 = vadd.f32 %v1000, %v1075
        %v1124 = vadd.f32 %v1001, %v1076
        %v1125 = vlaneseq
        %v1126 = vshrl.u32 %v1125, 7
        %v1127 = vsub.s32 2, %v1126
        %v1128 = vrot.slane %v871, %v1127
        %v1129 = vlaneseq
        %v1130 = vshrl.u32 %v1129, 7
        %v1131 = vsub.s32 6, %v1130
        %v1132 = vrot.slane %v871, %v1131
        %v1133 = vlaneseq
        %v1134 = vshrl.u32 %v1133, 7
        %v1135 = vsub.s32 2, %v1134
        %v1136 = vrot.slane %v872, %v1135
        %v1140 = vlaneseq
        %v1141 = vshrl.u32 %v1140, 7
        %v1142 = vsub.s32 2, %v1141
        %v1143 = vrot.slane %v1128, %v1142
        %v1144 = vlaneseq
        %v1145 = vshrl.u32 %v1144, 7
        %v1146 = vsub.s32 2, %v1145
        %v1147 = vrot.slane %v1132, %v1146
        %v1148 = vlaneseq
        %v1149 = vshrl.u32 %v1148, 7
        %v1150 = vsub.s32 2, %v1149
        %v1151 = vrot.slane %v1136, %v1150
        %v1152 = vmul.f32 %v693, %v1143
        %v1153 = vmul.f32 %v696, %v1147
        %v1154 = vmul.f32 %v699, %v1151
        %v1155 = vmul.f32 %v841, %v1143
        %v1156 = vmul.f32 %v842, %v1147
        %v1157 = vmul.f32 %v843, %v1151
        %v1158 = vmul.f32 %v702, %v1143
        %v1159 = vmul.f32 %v705, %v1147
        %v1160 = vmul.f32 %v708, %v1151
        %v1161 = vmul.f32 %v844, %v1143
        %v1162 = vmul.f32 %v845, %v1147
        %v1163 = vmul.f32 %v846, %v1151
        %v1164 = vmul.f32 %v711, %v1143
        %v1165 = vmul.f32 %v714, %v1147
        %v1166 = vmul.f32 %v717, %v1151
        %v1167 = vmul.f32 %v847, %v1143
        %v1168 = vmul.f32 %v848, %v1147
        %v1169 = vmul.f32 %v849, %v1151
        %v1170 = vmul.f32 %v720, %v1143
        %v1171 = vmul.f32 %v723, %v1147
        %v1172 = vmul.f32 %v726, %v1151
        %v1173 = vmul.f32 %v850, %v1143
        %v1174 = vmul.f32 %v851, %v1147
        %v1175 = vmul.f32 %v852, %v1151
        %v1176 = vmul.f32 %v729, %v1143
        %v1177 = vmul.f32 %v732, %v1147
        %v1178 = vmul.f32 %v735, %v1151
        %v1179 = vmul.f32 %v853, %v1143
        %v1180 = vmul.f32 %v854, %v1147
        %v1181 = vmul.f32 %v855, %v1151
        %v1182 = vmul.f32 %v738, %v1143
        %v1183 = vmul.f32 %v741, %v1147
        %v1184 = vmul.f32 %v744, %v1151
        %v1185 = vmul.f32 %v856, %v1143
        %v1186 = vmul.f32 %v857, %v1147
        %v1187 = vmul.f32 %v858, %v1151
        %v1188 = vmul.f32 %v747, %v1143
        %v1189 = vmul.f32 %v750, %v1147
        %v1190 = vmul.f32 %v753, %v1151
        %v1191 = vmul.f32 %v859, %v1143
        %v1192 = vmul.f32 %v860, %v1147
        %v1193 = vmul.f32 %v861, %v1151
        %v1194 = vmul.f32 %v756, %v1143
        %v1195 = vmul.f32 %v759, %v1147
        %v1196 = vmul.f32 %v762, %v1151
        %v1197 = vmul.f32 %v862, %v1143
        %v1198 = vmul.f32 %v863, %v1147
        %v1199 = vmul.f32 %v864, %v1151
        %v1200 = vadd.f32 %v1077, %v1152
        %v1201 = vadd.f32 %v1078, %v1153
        %v1202 = vadd.f32 %v1079, %v1154
        %v1203 = vadd.f32 %v1080, %v1155
        %v1204 = vadd.f32 %v1081, %v1156
        %v1205 = vadd.f32 %v1082, %v1157
        %v1206 = vadd.f32 %v1083, %v1158
        %v1207 = vadd.f32 %v1084, %v1159
        %v1208 = vadd.f32 %v1085, %v1160
        %v1209 = vadd.f32 %v1086, %v1161
        %v1210 = vadd.f32 %v1087, %v1162
        %v1211 = vadd.f32 %v1088, %v1163
        %v1212 = vadd.f32 %v1089, %v1164
        %v1213 = vadd.f32 %v1090, %v1165
        %v1214 = vadd.f32 %v1091, %v1166
        %v1215 = vadd.f32 %v1092, %v1167
        %v1216 = vadd.f32 %v1093, %v1168
        %v1217 = vadd.f32 %v1094, %v1169
        %v1218 = vadd.f32 %v1095, %v1170
        %v1219 = vadd.f32 %v1096, %v1171
        %v1220 = vadd.f32 %v1097, %v1172
        %v1221 = vadd.f32 %v1098, %v1173
        %v1222 = vadd.f32 %v1099, %v1174
        %v1223 = vadd.f32 %v1100, %v1175
        %v1224 = vadd.f32 %v1101, %v1176
        %v1225 = vadd.f32 %v1102, %v1177
        %v1226 = vadd.f32 %v1103, %v1178
        %v1227 = vadd.f32 %v1104, %v1179
        %v1228 = vadd.f32 %v1105, %v1180
        %v1229 = vadd.f32 %v1106, %v1181
        %v1230 = vadd.f32 %v1107, %v1182
        %v1231 = vadd.f32 %v1108, %v1183
        %v1232 = vadd.f32 %v1109, %v1184
        %v1233 = vadd.f32 %v1110, %v1185
        %v1234 = vadd.f32 %v1111, %v1186
        %v1235 = vadd.f32 %v1112, %v1187
        %v1236 = vadd.f32 %v1113, %v1188
        %v1237 = vadd.f32 %v1114, %v1189
        %v1238 = vadd.f32 %v1115, %v1190
        %v1239 = vadd.f32 %v1116, %v1191
        %v1240 = vadd.f32 %v1117, %v1192
        %v1241 = vadd.f32 %v1118, %v1193
        %v1242 = vadd.f32 %v1119, %v1194
        %v1243 = vadd.f32 %v1120, %v1195
        %v1244 = vadd.f32 %v1121, %v1196
        %v1245 = vadd.f32 %v1122, %v1197
        %v1246 = vadd.f32 %v1123, %v1198
        %v1247 = vadd.f32 %v1124, %v1199
        %v1250 = vlaneseq
        %v1251 = vshrl.u32 %v1250, 7
        %v1252 = vsub.s32 0, %v1251
        %v1253 = vrot.slane %v873, %v1252
        %v1254 = vlaneseq
        %v1255 = vshrl.u32 %v1254, 7
        %v1256 = vsub.s32 4, %v1255
        %v1257 = vrot.slane %v873, %v1256
        %v1258 = vlaneseq
        %v1259 = vshrl.u32 %v1258, 7
        %v1260 = vsub.s32 0, %v1259
        %v1261 = vrot.slane %v874, %v1260
        %v1265 = vlaneseq
        %v1266 = vshrl.u32 %v1265, 7
        %v1267 = vsub.s32 0, %v1266
        %v1268 = vrot.slane %v1253, %v1267
        %v1269 = vlaneseq
        %v1270 = vshrl.u32 %v1269, 7
        %v1271 = vsub.s32 0, %v1270
        %v1272 = vrot.slane %v1257, %v1271
        %v1273 = vlaneseq
        %v1274 = vshrl.u32 %v1273, 7
        %v1275 = vsub.s32 0, %v1274
        %v1276 = vrot.slane %v1261, %v1275
        %v1277 = vmul.f32 %v663, %v1268
        %v1278 = vmul.f32 %v664, %v1272
        %v1279 = vmul.f32 %v665, %v1276
        %v1280 = vmul.f32 %v523, %v1268
        %v1281 = vmul.f32 %v525, %v1272
        %v1282 = vmul.f32 %v527, %v1276
        %v1283 = vmul.f32 %v666, %v1268
        %v1284 = vmul.f32 %v667, %v1272
        %v1285 = vmul.f32 %v668, %v1276
        %v1286 = vmul.f32 %v532, %v1268
        %v1287 = vmul.f32 %v534, %v1272
        %v1288 = vmul.f32 %v536, %v1276
        %v1289 = vmul.f32 %v669, %v1268
        %v1290 = vmul.f32 %v670, %v1272
        %v1291 = vmul.f32 %v671, %v1276
        %v1292 = vmul.f32 %v541, %v1268
        %v1293 = vmul.f32 %v543, %v1272
        %v1294 = vmul.f32 %v545, %v1276
        %v1295 = vmul.f32 %v672, %v1268
        %v1296 = vmul.f32 %v673, %v1272
        %v1297 = vmul.f32 %v674, %v1276
        %v1298 = vmul.f32 %v550, %v1268
        %v1299 = vmul.f32 %v552, %v1272
        %v1300 = vmul.f32 %v554, %v1276
        %v1301 = vmul.f32 %v675, %v1268
        %v1302 = vmul.f32 %v676, %v1272
        %v1303 = vmul.f32 %v677, %v1276
        %v1304 = vmul.f32 %v559, %v1268
        %v1305 = vmul.f32 %v561, %v1272
        %v1306 = vmul.f32 %v563, %v1276
        %v1307 = vmul.f32 %v678, %v1268
        %v1308 = vmul.f32 %v679, %v1272
        %v1309 = vmul.f32 %v680, %v1276
        %v1310 = vmul.f32 %v568, %v1268
        %v1311 = vmul.f32 %v570, %v1272
        %v1312 = vmul.f32 %v572, %v1276
        %v1313 = vmul.f32 %v681, %v1268
        %v1314 = vmul.f32 %v682, %v1272
        %v1315 = vmul.f32 %v683, %v1276
        %v1316 = vmul.f32 %v577, %v1268
        %v1317 = vmul.f32 %v579, %v1272
        %v1318 = vmul.f32 %v581, %v1276
        %v1319 = vmul.f32 %v684, %v1268
        %v1320 = vmul.f32 %v685, %v1272
        %v1321 = vmul.f32 %v686, %v1276
        %v1322 = vmul.f32 %v586, %v1268
        %v1323 = vmul.f32 %v588, %v1272
        %v1324 = vmul.f32 %v590, %v1276
        %v1325 = vadd.f32 %v1200, %v1277
        %v1326 = vadd.f32 %v1201, %v1278
        %v1327 = vadd.f32 %v1202, %v1279
        %v1328 = vadd.f32 %v1203, %v1280
        %v1329 = vadd.f32 %v1204, %v1281
        %v1330 = vadd.f32 %v1205, %v1282
        %v1331 = vadd.f32 %v1206, %v1283
        %v1332 = vadd.f32 %v1207, %v1284
        %v1333 = vadd.f32 %v1208, %v1285
        %v1334 = vadd.f32 %v1209, %v1286
        %v1335 = vadd.f32 %v1210, %v1287
        %v1336 = vadd.f32 %v1211, %v1288
        %v1337 = vadd.f32 %v1212, %v1289
        %v1338 = vadd.f32 %v1213, %v1290
        %v1339 = vadd.f32 %v1214, %v1291
        %v1340 = vadd.f32 %v1215, %v1292
        %v1341 = vadd.f32 %v1216, %v1293
        %v1342 = vadd.f32 %v1217, %v1294
        %v1343 = vadd.f32 %v1218, %v1295
        %v1344 = vadd.f32 %v1219, %v1296
        %v1345 = vadd.f32 %v1220, %v1297
        %v1346 = vadd.f32 %v1221, %v1298
        %v1347 = vadd.f32 %v1222, %v1299
        %v1348 = vadd.f32 %v1223, %v1300
        %v1349 = vadd.f32 %v1224, %v1301
        %v1350 = vadd.f32 %v1225, %v1302
        %v1351 = vadd.f32 %v1226, %v1303
        %v1352 = vadd.f32 %v1227, %v1304
        %v1353 = vadd.f32 %v1228, %v1305
        %v1354 = vadd.f32 %v1229, %v1306
        %v1355 = vadd.f32 %v1230, %v1307
        %v1356 = vadd.f32 %v1231, %v1308
        %v1357 = vadd.f32 %v1232, %v1309
        %v1358 = vadd.f32 %v1233, %v1310
        %v1359 = vadd.f32 %v1234, %v1311
        %v1360 = vadd.f32 %v1235, %v1312
        %v1361 = vadd.f32 %v1236, %v1313
        %v1362 = vadd.f32 %v1237, %v1314
        %v1363 = vadd.f32 %v1238, %v1315
        %v1364 = vadd.f32 %v1239, %v1316
        %v1365 = vadd.f32 %v1240, %v1317
        %v1366 = vadd.f32 %v1241, %v1318
        %v1367 = vadd.f32 %v1242, %v1319
        %v1368 = vadd.f32 %v1243, %v1320
        %v1369 = vadd.f32 %v1244, %v1321
        %v1370 = vadd.f32 %v1245, %v1322
        %v1371 = vadd.f32 %v1246, %v1323
        %v1372 = vadd.f32 %v1247, %v1324
        %v1373 = vlaneseq
        %v1374 = vshrl.u32 %v1373, 7
        %v1375 = vsub.s32 1, %v1374
        %v1376 = vrot.slane %v873, %v1375
        %v1377 = vlaneseq
        %v1378 = vshrl.u32 %v1377, 7
        %v1379 = vsub.s32 5, %v1378
        %v1380 = vrot.slane %v873, %v1379
        %v1381 = vlaneseq
        %v1382 = vshrl.u32 %v1381, 7
        %v1383 = vsub.s32 1, %v1382
        %v1384 = vrot.slane %v874, %v1383
        %v1388 = vlaneseq
        %v1389 = vshrl.u32 %v1388, 7
        %v1390 = vsub.s32 1, %v1389
        %v1391 = vrot.slane %v1376, %v1390
        %v1392 = vlaneseq
        %v1393 = vshrl.u32 %v1392, 7
        %v1394 = vsub.s32 1, %v1393
        %v1395 = vrot.slane %v1380, %v1394
        %v1396 = vlaneseq
        %v1397 = vshrl.u32 %v1396, 7
        %v1398 = vsub.s32 1, %v1397
        %v1399 = vrot.slane %v1384, %v1398
        %v1400 = vmul.f32 %v401, %v1391
        %v1401 = vmul.f32 %v402, %v1395
        %v1402 = vmul.f32 %v403, %v1399
        %v1403 = vmul.f32 %v404, %v1391
        %v1404 = vmul.f32 %v405, %v1395
        %v1405 = vmul.f32 %v406, %v1399
        %v1406 = vmul.f32 %v407, %v1391
        %v1407 = vmul.f32 %v408, %v1395
        %v1408 = vmul.f32 %v409, %v1399
        %v1409 = vmul.f32 %v410, %v1391
        %v1410 = vmul.f32 %v411, %v1395
        %v1411 = vmul.f32 %v412, %v1399
        %v1412 = vmul.f32 %v413, %v1391
        %v1413 = vmul.f32 %v414, %v1395
        %v1414 = vmul.f32 %v415, %v1399
        %v1415 = vmul.f32 %v416, %v1391
        %v1416 = vmul.f32 %v417, %v1395
        %v1417 = vmul.f32 %v418, %v1399
        %v1418 = vmul.f32 %v419, %v1391
        %v1419 = vmul.f32 %v420, %v1395
        %v1420 = vmul.f32 %v421, %v1399
        %v1421 = vmul.f32 %v422, %v1391
        %v1422 = vmul.f32 %v423, %v1395
        %v1423 = vmul.f32 %v424, %v1399
        %v1424 = vmul.f32 %v425, %v1391
        %v1425 = vmul.f32 %v426, %v1395
        %v1426 = vmul.f32 %v427, %v1399
        %v1427 = vmul.f32 %v428, %v1391
        %v1428 = vmul.f32 %v429, %v1395
        %v1429 = vmul.f32 %v430, %v1399
        %v1430 = vmul.f32 %v431, %v1391
        %v1431 = vmul.f32 %v432, %v1395
        %v1432 = vmul.f32 %v433, %v1399
        %v1433 = vmul.f32 %v434, %v1391
        %v1434 = vmul.f32 %v435, %v1395
        %v1435 = vmul.f32 %v436, %v1399
        %v1436 = vmul.f32 %v437, %v1391
        %v1437 = vmul.f32 %v438, %v1395
        %v1438 = vmul.f32 %v439, %v1399
        %v1439 = vmul.f32 %v440, %v1391
        %v1440 = vmul.f32 %v441, %v1395
        %v1441 = vmul.f32 %v442, %v1399
        %v1442 = vmul.f32 %v443, %v1391
        %v1443 = vmul.f32 %v444, %v1395
        %v1444 = vmul.f32 %v445, %v1399
        %v1445 = vmul.f32 %v446, %v1391
        %v1446 = vmul.f32 %v447, %v1395
        %v1447 = vmul.f32 %v448, %v1399
        %v1448 = vadd.f32 %v1325, %v1400
        %v1449 = vadd.f32 %v1326, %v1401
        %v1450 = vadd.f32 %v1327, %v1402
        %v1451 = vadd.f32 %v1328, %v1403
        %v1452 = vadd.f32 %v1329, %v1404
        %v1453 = vadd.f32 %v1330, %v1405
        %v1454 = vadd.f32 %v1331, %v1406
        %v1455 = vadd.f32 %v1332, %v1407
        %v1456 = vadd.f32 %v1333, %v1408
        %v1457 = vadd.f32 %v1334, %v1409
        %v1458 = vadd.f32 %v1335, %v1410
        %v1459 = vadd.f32 %v1336, %v1411
        %v1460 = vadd.f32 %v1337, %v1412
        %v1461 = vadd.f32 %v1338, %v1413
        %v1462 = vadd.f32 %v1339, %v1414
        %v1463 = vadd.f32 %v1340, %v1415
        %v1464 = vadd.f32 %v1341, %v1416
        %v1465 = vadd.f32 %v1342, %v1417
        %v1466 = vadd.f32 %v1343, %v1418
        %v1467 = vadd.f32 %v1344, %v1419
        %v1468 = vadd.f32 %v1345, %v1420
        %v1469 = vadd.f32 %v1346, %v1421
        %v1470 = vadd.f32 %v1347, %v1422
        %v1471 = vadd.f32 %v1348, %v1423
        %v1472 = vadd.f32 %v1349, %v1424
        %v1473 = vadd.f32 %v1350, %v1425
        %v1474 = vadd.f32 %v1351, %v1426
        %v1475 = vadd.f32 %v1352, %v1427
        %v1476 = vadd.f32 %v1353, %v1428
        %v1477 = vadd.f32 %v1354, %v1429
        %v1478 = vadd.f32 %v1355, %v1430
        %v1479 = vadd.f32 %v1356, %v1431
        %v1480 = vadd.f32 %v1357, %v1432
        %v1481 = vadd.f32 %v1358, %v1433
        %v1482 = vadd.f32 %v1359, %v1434
        %v1483 = vadd.f32 %v1360, %v1435
        %v1484 = vadd.f32 %v1361, %v1436
        %v1485 = vadd.f32 %v1362, %v1437
        %v1486 = vadd.f32 %v1363, %v1438
        %v1487 = vadd.f32 %v1364, %v1439
        %v1488 = vadd.f32 %v1365, %v1440
        %v1489 = vadd.f32 %v1366, %v1441
        %v1490 = vadd.f32 %v1367, %v1442
        %v1491 = vadd.f32 %v1368, %v1443
        %v1492 = vadd.f32 %v1369, %v1444
        %v1493 = vadd.f32 %v1370, %v1445
        %v1494 = vadd.f32 %v1371, %v1446
        %v1495 = vadd.f32 %v1372, %v1447
        %v1496 = vlaneseq
        %v1497 = vshrl.u32 %v1496, 7
        %v1498 = vsub.s32 2, %v1497
        %v1499 = vrot.slane %v873, %v1498
        %v1500 = vlaneseq
        %v1501 = vshrl.u32 %v1500, 7
        %v1502 = vsub.s32 6, %v1501
        %v1503 = vrot.slane %v873, %v1502
        %v1504 = vlaneseq
        %v1505 = vshrl.u32 %v1504, 7
        %v1506 = vsub.s32 2, %v1505
        %v1507 = vrot.slane %v874, %v1506
        %v1511 = vlaneseq
        %v1512 = vshrl.u32 %v1511, 7
        %v1513 = vsub.s32 2, %v1512
        %v1514 = vrot.slane %v1499, %v1513
        %v1515 = vlaneseq
        %v1516 = vshrl.u32 %v1515, 7
        %v1517 = vsub.s32 2, %v1516
        %v1518 = vrot.slane %v1503, %v1517
        %v1519 = vlaneseq
        %v1520 = vshrl.u32 %v1519, 7
        %v1521 = vsub.s32 2, %v1520
        %v1522 = vrot.slane %v1507, %v1521
        %v1523 = vmul.f32 %v702, %v1514
        %v1524 = vmul.f32 %v705, %v1518
        %v1525 = vmul.f32 %v708, %v1522
        %v1526 = vmul.f32 %v844, %v1514
        %v1527 = vmul.f32 %v845, %v1518
        %v1528 = vmul.f32 %v846, %v1522
        %v1529 = vmul.f32 %v711, %v1514
        %v1530 = vmul.f32 %v714, %v1518
        %v1531 = vmul.f32 %v717, %v1522
        %v1532 = vmul.f32 %v847, %v1514
        %v1533 = vmul.f32 %v848, %v1518
        %v1534 = vmul.f32 %v849, %v1522
        %v1535 = vmul.f32 %v720, %v1514
        %v1536 = vmul.f32 %v723, %v1518
        %v1537 = vmul.f32 %v726, %v1522
        %v1538 = vmul.f32 %v850, %v1514
        %v1539 = vmul.f32 %v851, %v1518
        %v1540 = vmul.f32 %v852, %v1522
        %v1541 = vmul.f32 %v729, %v1514
        %v1542 = vmul.f32 %v732, %v1518
        %v1543 = vmul.f32 %v735, %v1522
        %v1544 = vmul.f32 %v853, %v1514
        %v1545 = vmul.f32 %v854, %v1518
        %v1546 = vmul.f32 %v855, %v1522
        %v1547 = vmul.f32 %v738, %v1514
        %v1548 = vmul.f32 %v741, %v1518
        %v1549 = vmul.f32 %v744, %v1522
        %v1550 = vmul.f32 %v856, %v1514
        %v1551 = vmul.f32 %v857, %v1518
        %v1552 = vmul.f32 %v858, %v1522
        %v1553 = vmul.f32 %v747, %v1514
        %v1554 = vmul.f32 %v750, %v1518
        %v1555 = vmul.f32 %v753, %v1522
        %v1556 = vmul.f32 %v859, %v1514
        %v1557 = vmul.f32 %v860, %v1518
        %v1558 = vmul.f32 %v861, %v1522
        %v1559 = vmul.f32 %v756, %v1514
        %v1560 = vmul.f32 %v759, %v1518
        %v1561 = vmul.f32 %v762, %v1522
        %v1562 = vmul.f32 %v862, %v1514
        %v1563 = vmul.f32 %v863, %v1518
        %v1564 = vmul.f32 %v864, %v1522
        %v1565 = vmul.f32 %v765, %v1514
        %v1566 = vmul.f32 %v768, %v1518
        %v1567 = vmul.f32 %v771, %v1522
        %v1568 = vmul.f32 %v865, %v1514
        %v1569 = vmul.f32 %v866, %v1518
        %v1570 = vmul.f32 %v867, %v1522
        %v1571 = vadd.f32 %v1448, %v1523
        %v1572 = vadd.f32 %v1449, %v1524
        %v1573 = vadd.f32 %v1450, %v1525
        %v1574 = vadd.f32 %v1451, %v1526
        %v1575 = vadd.f32 %v1452, %v1527
        %v1576 = vadd.f32 %v1453, %v1528
        %v1577 = vadd.f32 %v1454, %v1529
        %v1578 = vadd.f32 %v1455, %v1530
        %v1579 = vadd.f32 %v1456, %v1531
        %v1580 = vadd.f32 %v1457, %v1532
        %v1581 = vadd.f32 %v1458, %v1533
        %v1582 = vadd.f32 %v1459, %v1534
        %v1583 = vadd.f32 %v1460, %v1535
        %v1584 = vadd.f32 %v1461, %v1536
        %v1585 = vadd.f32 %v1462, %v1537
        %v1586 = vadd.f32 %v1463, %v1538
        %v1587 = vadd.f32 %v1464, %v1539
        %v1588 = vadd.f32 %v1465, %v1540
        %v1589 = vadd.f32 %v1466, %v1541
        %v1590 = vadd.f32 %v1467, %v1542
        %v1591 = vadd.f32 %v1468, %v1543
        %v1592 = vadd.f32 %v1469, %v1544
        %v1593 = vadd.f32 %v1470, %v1545
        %v1594 = vadd.f32 %v1471, %v1546
        %v1595 = vadd.f32 %v1472, %v1547
        %v1596 = vadd.f32 %v1473, %v1548
        %v1597 = vadd.f32 %v1474, %v1549
        %v1598 = vadd.f32 %v1475, %v1550
        %v1599 = vadd.f32 %v1476, %v1551
        %v1600 = vadd.f32 %v1477, %v1552
        %v1601 = vadd.f32 %v1478, %v1553
        %v1602 = vadd.f32 %v1479, %v1554
        %v1603 = vadd.f32 %v1480, %v1555
        %v1604 = vadd.f32 %v1481, %v1556
        %v1605 = vadd.f32 %v1482, %v1557
        %v1606 = vadd.f32 %v1483, %v1558
        %v1607 = vadd.f32 %v1484, %v1559
        %v1608 = vadd.f32 %v1485, %v1560
        %v1609 = vadd.f32 %v1486, %v1561
        %v1610 = vadd.f32 %v1487, %v1562
        %v1611 = vadd.f32 %v1488, %v1563
        %v1612 = vadd.f32 %v1489, %v1564
        %v1613 = vadd.f32 %v1490, %v1565
        %v1614 = vadd.f32 %v1491, %v1566
        %v1615 = vadd.f32 %v1492, %v1567
        %v1616 = vadd.f32 %v1493, %v1568
        %v1617 = vadd.f32 %v1494, %v1569
        %v1618 = vadd.f32 %v1495, %v1570
        %v1621 = vlaneseq
        %v1622 = vshrl.u32 %v1621, 7
        %v1623 = vsub.s32 0, %v1622
        %v1624 = vrot.slane %v875, %v1623
        %v1625 = vlaneseq
        %v1626 = vshrl.u32 %v1625, 7
        %v1627 = vsub.s32 4, %v1626
        %v1628 = vrot.slane %v875, %v1627
        %v1629 = vlaneseq
        %v1630 = vshrl.u32 %v1629, 7
        %v1631 = vsub.s32 0, %v1630
        %v1632 = vrot.slane %v876, %v1631
        %v1636 = vlaneseq
        %v1637 = vshrl.u32 %v1636, 7
        %v1638 = vsub.s32 0, %v1637
        %v1639 = vrot.slane %v1624, %v1638
        %v1640 = vlaneseq
        %v1641 = vshrl.u32 %v1640, 7
        %v1642 = vsub.s32 0, %v1641
        %v1643 = vrot.slane %v1628, %v1642
        %v1644 = vlaneseq
        %v1645 = vshrl.u32 %v1644, 7
        %v1646 = vsub.s32 0, %v1645
        %v1647 = vrot.slane %v1632, %v1646
        %v1648 = vmul.f32 %v666, %v1639
        %v1649 = vmul.f32 %v667, %v1643
        %v1650 = vmul.f32 %v668, %v1647
        %v1651 = vmul.f32 %v532, %v1639
        %v1652 = vmul.f32 %v534, %v1643
        %v1653 = vmul.f32 %v536, %v1647
        %v1654 = vmul.f32 %v669, %v1639
        %v1655 = vmul.f32 %v670, %v1643
        %v1656 = vmul.f32 %v671, %v1647
        %v1657 = vmul.f32 %v541, %v1639
        %v1658 = vmul.f32 %v543, %v1643
        %v1659 = vmul.f32 %v545, %v1647
        %v1660 = vmul.f32 %v672, %v1639
        %v1661 = vmul.f32 %v673, %v1643
        %v1662 = vmul.f32 %v674, %v1647
        %v1663 = vmul.f32 %v550, %v1639
        %v1664 = vmul.f32 %v552, %v1643
        %v1665 = vmul.f32 %v554, %v1647
        %v1666 = vmul.f32 %v675, %v1639
        %v1667 = vmul.f32 %v676, %v1643
        %v1668 = vmul.f32 %v677, %v1647
        %v1669 = vmul.f32 %v559, %v1639
        %v1670 = vmul.f32 %v561, %v1643
        %v1671 = vmul.f32 %v563, %v1647
        %v1672 = vmul.f32 %v678, %v1639
        %v1673 = vmul.f32 %v679, %v1643
        %v1674 = vmul.f32 %v680, %v1647
        %v1675 = vmul.f32 %v568, %v1639
        %v1676 = vmul.f32 %v570, %v1643
        %v1677 = vmul.f32 %v572, %v1647
        %v1678 = vmul.f32 %v681, %v1639
        %v1679 = vmul.f32 %v682, %v1643
        %v1680 = vmul.f32 %v683, %v1647
        %v1681 = vmul.f32 %v577, %v1639
        %v1682 = vmul.f32 %v579, %v1643
        %v1683 = vmul.f32 %v581, %v1647
        %v1684 = vmul.f32 %v684, %v1639
        %v1685 = vmul.f32 %v685, %v1643
        %v1686 = vmul.f32 %v686, %v1647
        %v1687 = vmul.f32 %v586, %v1639
        %v1688 = vmul.f32 %v588, %v1643
        %v1689 = vmul.f32 %v590, %v1647
        %v1690 = vmul.f32 %v687, %v1639
        %v1691 = vmul.f32 %v688, %v1643
        %v1692 = vmul.f32 %v689, %v1647
        %v1693 = vmul.f32 %v595, %v1639
        %v1694 = vmul.f32 %v597, %v1643
        %v1695 = vmul.f32 %v599, %v1647
        %v1696 = vadd.f32 %v1571, %v1648
        %v1697 = vadd.f32 %v1572, %v1649
        %v1698 = vadd.f32 %v1573, %v1650
        %v1699 = vadd.f32 %v1574, %v1651
        %v1700 = vadd.f32 %v1575, %v1652
        %v1701 = vadd.f32 %v1576, %v1653
        %v1702 = vadd.f32 %v1577, %v1654
        %v1703 = vadd.f32 %v1578, %v1655
        %v1704 = vadd.f32 %v1579, %v1656
        %v1705 = vadd.f32 %v1580, %v1657
        %v1706 = vadd.f32 %v1581, %v1658
        %v1707 = vadd.f32 %v1582, %v1659
        %v1708 = vadd.f32 %v1583, %v1660
        %v1709 = vadd.f32 %v1584, %v1661
        %v1710 = vadd.f32 %v1585, %v1662
        %v1711 = vadd.f32 %v1586, %v1663
        %v1712 = vadd.f32 %v1587, %v1664
        %v1713 = vadd.f32 %v1588, %v1665
        %v1714 = vadd.f32 %v1589, %v1666
        %v1715 = vadd.f32 %v1590, %v1667
        %v1716 = vadd.f32 %v1591, %v1668
        %v1717 = vadd.f32 %v1592, %v1669
        %v1718 = vadd.f32 %v1593, %v1670
        %v1719 = vadd.f32 %v1594, %v1671
        %v1720 = vadd.f32 %v1595, %v1672
        %v1721 = vadd.f32 %v1596, %v1673
        %v1722 = vadd.f32 %v1597, %v1674
        %v1723 = vadd.f32 %v1598, %v1675
        %v1724 = vadd.f32 %v1599, %v1676
        %v1725 = vadd.f32 %v1600, %v1677
        %v1726 = vadd.f32 %v1601, %v1678
        %v1727 = vadd.f32 %v1602, %v1679
        %v1728 = vadd.f32 %v1603, %v1680
        %v1729 = vadd.f32 %v1604, %v1681
        %v1730 = vadd.f32 %v1605, %v1682
        %v1731 = vadd.f32 %v1606, %v1683
        %v1732 = vadd.f32 %v1607, %v1684
        %v1733 = vadd.f32 %v1608, %v1685
        %v1734 = vadd.f32 %v1609, %v1686
        %v1735 = vadd.f32 %v1610, %v1687
        %v1736 = vadd.f32 %v1611, %v1688
        %v1737 = vadd.f32 %v1612, %v1689
        %v1738 = vadd.f32 %v1613, %v1690
        %v1739 = vadd.f32 %v1614, %v1691
        %v1740 = vadd.f32 %v1615, %v1692
        %v1741 = vadd.f32 %v1616, %v1693
        %v1742 = vadd.f32 %v1617, %v1694
        %v1743 = vadd.f32 %v1618, %v1695
        %v1744 = vlaneseq
        %v1745 = vshrl.u32 %v1744, 7
        %v1746 = vsub.s32 1, %v1745
        %v1747 = vrot.slane %v875, %v1746
        %v1748 = vlaneseq
        %v1749 = vshrl.u32 %v1748, 7
        %v1750 = vsub.s32 5, %v1749
        %v1751 = vrot.slane %v875, %v1750
        %v1752 = vlaneseq
        %v1753 = vshrl.u32 %v1752, 7
        %v1754 = vsub.s32 1, %v1753
        %v1755 = vrot.slane %v876, %v1754
        %v1759 = vlaneseq
        %v1760 = vshrl.u32 %v1759, 7
        %v1761 = vsub.s32 1, %v1760
        %v1762 = vrot.slane %v1747, %v1761
        %v1763 = vlaneseq
        %v1764 = vshrl.u32 %v1763, 7
        %v1765 = vsub.s32 1, %v1764
        %v1766 = vrot.slane %v1751, %v1765
        %v1767 = vlaneseq
        %v1768 = vshrl.u32 %v1767, 7
        %v1769 = vsub.s32 1, %v1768
        %v1770 = vrot.slane %v1755, %v1769
        %v1771 = vmul.f32 %v407, %v1762
        %v1772 = vmul.f32 %v408, %v1766
        %v1773 = vmul.f32 %v409, %v1770
        %v1774 = vmul.f32 %v410, %v1762
        %v1775 = vmul.f32 %v411, %v1766
        %v1776 = vmul.f32 %v412, %v1770
        %v1777 = vmul.f32 %v413, %v1762
        %v1778 = vmul.f32 %v414, %v1766
        %v1779 = vmul.f32 %v415, %v1770
        %v1780 = vmul.f32 %v416, %v1762
        %v1781 = vmul.f32 %v417, %v1766
        %v1782 = vmul.f32 %v418, %v1770
        %v1783 = vmul.f32 %v419, %v1762
        %v1784 = vmul.f32 %v420, %v1766
        %v1785 = vmul.f32 %v421, %v1770
        %v1786 = vmul.f32 %v422, %v1762
        %v1787 = vmul.f32 %v423, %v1766
        %v1788 = vmul.f32 %v424, %v1770
        %v1789 = vmul.f32 %v425, %v1762
        %v1790 = vmul.f32 %v426, %v1766
        %v1791 = vmul.f32 %v427, %v1770
        %v1792 = vmul.f32 %v428, %v1762
        %v1793 = vmul.f32 %v429, %v1766
        %v1794 = vmul.f32 %v430, %v1770
        %v1795 = vmul.f32 %v431, %v1762
        %v1796 = vmul.f32 %v432, %v1766
        %v1797 = vmul.f32 %v433, %v1770
        %v1798 = vmul.f32 %v434, %v1762
        %v1799 = vmul.f32 %v435, %v1766
        %v1800 = vmul.f32 %v436, %v1770
        %v1801 = vmul.f32 %v437, %v1762
        %v1802 = vmul.f32 %v438, %v1766
        %v1803 = vmul.f32 %v439, %v1770
        %v1804 = vmul.f32 %v440, %v1762
        %v1805 = vmul.f32 %v441, %v1766
        %v1806 = vmul.f32 %v442, %v1770
        %v1807 = vmul.f32 %v443, %v1762
        %v1808 = vmul.f32 %v444, %v1766
        %v1809 = vmul.f32 %v445, %v1770
        %v1810 = vmul.f32 %v446, %v1762
        %v1811 = vmul.f32 %v447, %v1766
        %v1812 = vmul.f32 %v448, %v1770
        %v1813 = vmul.f32 %v395, %v1762
        %v1814 = vmul.f32 %v396, %v1766
        %v1815 = vmul.f32 %v397, %v1770
        %v1816 = vmul.f32 %v398, %v1762
        %v1817 = vmul.f32 %v399, %v1766
        %v1818 = vmul.f32 %v400, %v1770
        %v1819 = vadd.f32 %v1696, %v1771
        %v1820 = vadd.f32 %v1697, %v1772
        %v1821 = vadd.f32 %v1698, %v1773
        %v1822 = vadd.f32 %v1699, %v1774
        %v1823 = vadd.f32 %v1700, %v1775
        %v1824 = vadd.f32 %v1701, %v1776
        %v1825 = vadd.f32 %v1702, %v1777
        %v1826 = vadd.f32 %v1703, %v1778
        %v1827 = vadd.f32 %v1704, %v1779
        %v1828 = vadd.f32 %v1705, %v1780
        %v1829 = vadd.f32 %v1706, %v1781
        %v1830 = vadd.f32 %v1707, %v1782
        %v1831 = vadd.f32 %v1708, %v1783
        %v1832 = vadd.f32 %v1709, %v1784
        %v1833 = vadd.f32 %v1710, %v1785
        %v1834 = vadd.f32 %v1711, %v1786
        %v1835 = vadd.f32 %v1712, %v1787
        %v1836 = vadd.f32 %v1713, %v1788
        %v1837 = vadd.f32 %v1714, %v1789
        %v1838 = vadd.f32 %v1715, %v1790
        %v1839 = vadd.f32 %v1716, %v1791
        %v1840 = vadd.f32 %v1717, %v1792
        %v1841 = vadd.f32 %v1718, %v1793
        %v1842 = vadd.f32 %v1719, %v1794
        %v1843 = vadd.f32 %v1720, %v1795
        %v1844 = vadd.f32 %v1721, %v1796
        %v1845 = vadd.f32 %v1722, %v1797
        %v1846 = vadd.f32 %v1723, %v1798
        %v1847 = vadd.f32 %v1724, %v1799
        %v1848 = vadd.f32 %v1725, %v1800
        %v1849 = vadd.f32 %v1726, %v1801
        %v1850 = vadd.f32 %v1727, %v1802
        %v1851 = vadd.f32 %v1728, %v1803
        %v1852 = vadd.f32 %v1729, %v1804
        %v1853 = vadd.f32 %v1730, %v1805
        %v1854 = vadd.f32 %v1731, %v1806
        %v1855 = vadd.f32 %v1732, %v1807
        %v1856 = vadd.f32 %v1733, %v1808
        %v1857 = vadd.f32 %v1734, %v1809
        %v1858 = vadd.f32 %v1735, %v1810
        %v1859 = vadd.f32 %v1736, %v1811
        %v1860 = vadd.f32 %v1737, %v1812
        %v1861 = vadd.f32 %v1738, %v1813
        %v1862 = vadd.f32 %v1739, %v1814
        %v1863 = vadd.f32 %v1740, %v1815
        %v1864 = vadd.f32 %v1741, %v1816
        %v1865 = vadd.f32 %v1742, %v1817
        %v1866 = vadd.f32 %v1743, %v1818
        %v1867 = vlaneseq
        %v1868 = vshrl.u32 %v1867, 7
        %v1869 = vsub.s32 2, %v1868
        %v1870 = vrot.slane %v875, %v1869
        %v1871 = vlaneseq
        %v1872 = vshrl.u32 %v1871, 7
        %v1873 = vsub.s32 6, %v1872
        %v1874 = vrot.slane %v875, %v1873
        %v1875 = vlaneseq
        %v1876 = vshrl.u32 %v1875, 7
        %v1877 = vsub.s32 2, %v1876
        %v1878 = vrot.slane %v876, %v1877
        %v1882 = vlaneseq
        %v1883 = vshrl.u32 %v1882, 7
        %v1884 = vsub.s32 2, %v1883
        %v1885 = vrot.slane %v1870, %v1884
        %v1886 = vlaneseq
        %v1887 = vshrl.u32 %v1886, 7
        %v1888 = vsub.s32 2, %v1887
        %v1889 = vrot.slane %v1874, %v1888
        %v1890 = vlaneseq
        %v1891 = vshrl.u32 %v1890, 7
        %v1892 = vsub.s32 2, %v1891
        %v1893 = vrot.slane %v1878, %v1892
        %v1894 = vmul.f32 %v711, %v1885
        %v1895 = vmul.f32 %v714, %v1889
        %v1896 = vmul.f32 %v717, %v1893
        %v1897 = vmul.f32 %v847, %v1885
        %v1898 = vmul.f32 %v848, %v1889
        %v1899 = vmul.f32 %v849, %v1893
        %v1900 = vmul.f32 %v720, %v1885
        %v1901 = vmul.f32 %v723, %v1889
        %v1902 = vmul.f32 %v726, %v1893
        %v1903 = vmul.f32 %v850, %v1885
        %v1904 = vmul.f32 %v851, %v1889
        %v1905 = vmul.f32 %v852, %v1893
        %v1906 = vmul.f32 %v729, %v1885
        %v1907 = vmul.f32 %v732, %v1889
        %v1908 = vmul.f32 %v735, %v1893
        %v1909 = vmul.f32 %v853, %v1885
        %v1910 = vmul.f32 %v854, %v1889
        %v1911 = vmul.f32 %v855, %v1893
        %v1912 = vmul.f32 %v738, %v1885
        %v1913 = vmul.f32 %v741, %v1889
        %v1914 = vmul.f32 %v744, %v1893
        %v1915 = vmul.f32 %v856, %v1885
        %v1916 = vmul.f32 %v857, %v1889
        %v1917 = vmul.f32 %v858, %v1893
        %v1918 = vmul.f32 %v747, %v1885
        %v1919 = vmul.f32 %v750, %v1889
        %v1920 = vmul.f32 %v753, %v1893
        %v1921 = vmul.f32 %v859, %v1885
        %v1922 = vmul.f32 %v860, %v1889
        %v1923 = vmul.f32 %v861, %v1893
        %v1924 = vmul.f32 %v756, %v1885
        %v1925 = vmul.f32 %v759, %v1889
        %v1926 = vmul.f32 %v762, %v1893
        %v1927 = vmul.f32 %v862, %v1885
        %v1928 = vmul.f32 %v863, %v1889
        %v1929 = vmul.f32 %v864, %v1893
        %v1930 = vmul.f32 %v765, %v1885
        %v1931 = vmul.f32 %v768, %v1889
        %v1932 = vmul.f32 %v771, %v1893
        %v1933 = vmul.f32 %v865, %v1885
        %v1934 = vmul.f32 %v866, %v1889
        %v1935 = vmul.f32 %v867, %v1893
        %v1936 = vmul.f32 %v774, %v1885
        %v1937 = vmul.f32 %v777, %v1889
        %v1938 = vmul.f32 %v780, %v1893
        %v1939 = vmul.f32 %v868, %v1885
        %v1940 = vmul.f32 %v869, %v1889
        %v1941 = vmul.f32 %v870, %v1893
        %v1942 = vadd.f32 %v1819, %v1894
        %v1943 = vadd.f32 %v1820, %v1895
        %v1944 = vadd.f32 %v1821, %v1896
        %v1945 = vadd.f32 %v1822, %v1897
        %v1946 = vadd.f32 %v1823, %v1898
        %v1947 = vadd.f32 %v1824, %v1899
        %v1948 = vadd.f32 %v1825, %v1900
        %v1949 = vadd.f32 %v1826, %v1901
        %v1950 = vadd.f32 %v1827, %v1902
        %v1951 = vadd.f32 %v1828, %v1903
        %v1952 = vadd.f32 %v1829, %v1904
        %v1953 = vadd.f32 %v1830, %v1905
        %v1954 = vadd.f32 %v1831, %v1906
        %v1955 = vadd.f32 %v1832, %v1907
        %v1956 = vadd.f32 %v1833, %v1908
        %v1957 = vadd.f32 %v1834, %v1909
        %v1958 = vadd.f32 %v1835, %v1910
        %v1959 = vadd.f32 %v1836, %v1911
        %v1960 = vadd.f32 %v1837, %v1912
        %v1961 = vadd.f32 %v1838, %v1913
        %v1962 = vadd.f32 %v1839, %v1914
        %v1963 = vadd.f32 %v1840, %v1915
        %v1964 = vadd.f32 %v1841, %v1916
        %v1965 = vadd.f32 %v1842, %v1917
        %v1966 = vadd.f32 %v1843, %v1918
        %v1967 = vadd.f32 %v1844, %v1919
        %v1968 = vadd.f32 %v1845, %v1920
        %v1969 = vadd.f32 %v1846, %v1921
        %v1970 = vadd.f32 %v1847, %v1922
        %v1971 = vadd.f32 %v1848, %v1923
        %v1972 = vadd.f32 %v1849, %v1924
        %v1973 = vadd.f32 %v1850, %v1925
        %v1974 = vadd.f32 %v1851, %v1926
        %v1975 = vadd.f32 %v1852, %v1927
        %v1976 = vadd.f32 %v1853, %v1928
        %v1977 = vadd.f32 %v1854, %v1929
        %v1978 = vadd.f32 %v1855, %v1930
        %v1979 = vadd.f32 %v1856, %v1931
        %v1980 = vadd.f32 %v1857, %v1932
        %v1981 = vadd.f32 %v1858, %v1933
        %v1982 = vadd.f32 %v1859, %v1934
        %v1983 = vadd.f32 %v1860, %v1935
        %v1984 = vadd.f32 %v1861, %v1936
        %v1985 = vadd.f32 %v1862, %v1937
        %v1986 = vadd.f32 %v1863, %v1938
        %v1987 = vadd.f32 %v1864, %v1939
        %v1988 = vadd.f32 %v1865, %v1940
        %v1989 = vadd.f32 %v1866, %v1941
        %1990 = vst [vmem:[%s358] sm:$0xff] %v1942
        %1991 = vst [vmem:[%s358 + $0x8] sm:$0xff] %v1943
        %vm1992 = vcmask 261120
        %1993 = vst.msk [vmem:[%s358 + $0x10] sm:$0xff] %vm1992, %v1944
        %1994 = vst [vmem:[%s358 + $0x18] sm:$0xff] %v1945
        %1995 = vst [vmem:[%s358 + $0x20] sm:$0xff] %v1946
        %1996 = vst.msk [vmem:[%s358 + $0x28] sm:$0xff] %vm1992, %v1947
        %1997 = vst [vmem:[%s358 + $0x30] sm:$0xff] %v1948
        %1998 = vst [vmem:[%s358 + $0x38] sm:$0xff] %v1949
        %1999 = vst.msk [vmem:[%s358 + $0x40] sm:$0xff] %vm1992, %v1950
        %2000 = vst [vmem:[%s358 + $0x48] sm:$0xff] %v1951
        %2001 = vst [vmem:[%s358 + $0x50] sm:$0xff] %v1952
        %2002 = vst.msk [vmem:[%s358 + $0x58] sm:$0xff] %vm1992, %v1953
        %2003 = vst [vmem:[%s358 + $0x60] sm:$0xff] %v1954
        %2004 = vst [vmem:[%s358 + $0x68] sm:$0xff] %v1955
        %2005 = vst.msk [vmem:[%s358 + $0x70] sm:$0xff] %vm1992, %v1956
        %2006 = vst [vmem:[%s358 + $0x78] sm:$0xff] %v1957
        %2007 = vst [vmem:[%s358 + $0x80] sm:$0xff] %v1958
        %2008 = vst.msk [vmem:[%s358 + $0x88] sm:$0xff] %vm1992, %v1959
        %2009 = vst [vmem:[%s358 + $0x90] sm:$0xff] %v1960
        %2010 = vst [vmem:[%s358 + $0x98] sm:$0xff] %v1961
        %2011 = vst.msk [vmem:[%s358 + $0xa0] sm:$0xff] %vm1992, %v1962
        %2012 = vst [vmem:[%s358 + $0xa8] sm:$0xff] %v1963
        %2013 = vst [vmem:[%s358 + $0xb0] sm:$0xff] %v1964
        %2014 = vst.msk [vmem:[%s358 + $0xb8] sm:$0xff] %vm1992, %v1965
        %2015 = vst [vmem:[%s358 + $0xc0] sm:$0xff] %v1966
        %2016 = vst [vmem:[%s358 + $0xc8] sm:$0xff] %v1967
        %2017 = vst.msk [vmem:[%s358 + $0xd0] sm:$0xff] %vm1992, %v1968
        %2018 = vst [vmem:[%s358 + $0xd8] sm:$0xff] %v1969
        %2019 = vst [vmem:[%s358 + $0xe0] sm:$0xff] %v1970
        %2020 = vst.msk [vmem:[%s358 + $0xe8] sm:$0xff] %vm1992, %v1971
        %2021 = vst [vmem:[%s358 + $0xf0] sm:$0xff] %v1972
        %2022 = vst [vmem:[%s358 + $0xf8] sm:$0xff] %v1973
        %2023 = vst.msk [vmem:[%s358 + $0x100] sm:$0xff] %vm1992, %v1974
        %2024 = vst [vmem:[%s358 + $0x108] sm:$0xff] %v1975
        %2025 = vst [vmem:[%s358 + $0x110] sm:$0xff] %v1976
        %2026 = vst.msk [vmem:[%s358 + $0x118] sm:$0xff] %vm1992, %v1977
        %2027 = vst [vmem:[%s358 + $0x120] sm:$0xff] %v1978
        %2028 = vst [vmem:[%s358 + $0x128] sm:$0xff] %v1979
        %2029 = vst.msk [vmem:[%s358 + $0x130] sm:$0xff] %vm1992, %v1980
        %2030 = vst [vmem:[%s358 + $0x138] sm:$0xff] %v1981
        %2031 = vst [vmem:[%s358 + $0x140] sm:$0xff] %v1982
        %2032 = vst.msk [vmem:[%s358 + $0x148] sm:$0xff] %vm1992, %v1983
        %2033 = vst [vmem:[%s358 + $0x150] sm:$0xff] %v1984
        %2034 = vst [vmem:[%s358 + $0x158] sm:$0xff] %v1985
        %2035 = vst.msk [vmem:[%s358 + $0x160] sm:$0xff] %vm1992, %v1986
        %2036 = vst [vmem:[%s358 + $0x168] sm:$0xff] %v1987
        %2037 = vst [vmem:[%s358 + $0x170] sm:$0xff] %v1988
        %2038 = vst.msk [vmem:[%s358 + $0x178] sm:$0xff] %vm1992, %v1989
        %s2039 = sand.u32 %s168, 1
        %s2040 = scalar_lea.sflag [#allocation4], %s2039
        %s2041 = sand.u32 %s168, 1
        %s2042 = smul.addr %s2041, 384
        %s2043 = scalar_lea.vmem [#allocation10], %s2042
        // Predicated region
        $region53: #{tpu_custom_call.1} parent=35 // pred_check
          %p2044 = pneg %p178
        $region54: #{tpu_custom_call.1} parent=35 // pred_check_branch
          %2046 = sbr.rel (%p2044) target = $region56
        $region55: #{tpu_custom_call.1} parent=35 // pred_region
          %s2047 = smul.u32 8, %s30
          %s2049 = ssub.s32 6144, 6144
          %2050 = vsyncadd %s2040, %s2049
          %s2051 = smul.addr %s2047, 6
          %s2052 = smul.addr %s29, 96
          %s2053 = sadd.s32 %s2051, %s2052
          %s2054 = smul.addr %s2053, 128
          %s2055 = scalar_lea.hbm %s4, %s2054
          %s2056 = sshll.u32 %s2043, 4
          %s2057 = int_to_ptr.vmem [resolvable:$true] %s2056
          %2062 = dma.vmem_to_hbm [thread:$0]  %s2057, 6144, %s2055, %s2040, 384, 384, 24
        $region56: #{tpu_custom_call.1} parent=35 // pred_fallthru
          _
      $region36: #{tpu_custom_call.1} parent=5 // pred_fallthru
        _
      %p2063 = scmp.le.s32.totalorder 2, %s20
      // Predicated region
      $region57: #{tpu_custom_call.1} parent=5 // pred_check
        %p2064 = pneg %p2063
      $region58: #{tpu_custom_call.1} parent=5 // pred_check_branch
        %2066 = sbr.rel (%p2064) target = $region60
      $region59: #{tpu_custom_call.1} parent=5 // pred_region
        %s2067 = ssub.s32 %s20, 2
        // Predicated region
        $region61: #{tpu_custom_call.1} parent=59 // pred_check
          %p2068 = pneg %p184
        $region62: #{tpu_custom_call.1} parent=59 // pred_check_branch
          %2070 = sbr.rel (%p2068) target = $region64
        $region63: #{tpu_custom_call.1} parent=59 // pred_region
          %s2071 = sand.u32 %s169, 1
          %s2072 = scalar_lea.sflag [#allocation4], %s2071
          %s2073 = sand.u32 %s169, 1
          %s2074 = smul.addr %s2073, 384
          %s2075 = scalar_lea.vmem [#allocation10], %s2074
          %2076 = dma.done %s2072, 6144
        $region64: #{tpu_custom_call.1} parent=59 // pred_fallthru
          _
      $region60: #{tpu_custom_call.1} parent=5 // pred_fallthru
        _
    $region6: #{tpu_custom_call.1} parent=1 // loop_footer
      %s24 = sadd.s32 1, %s20
    $region7: #{tpu_custom_call.1} parent=1 // loop_footer_branch
      %19 = sbr.rel target = $region3
    $region8: #{tpu_custom_call.1} parent=1 // loop_exit
      _
    %2077 = vsyncpa [#allocation3], 1
    %s2078 = scalar_lea.sflag [#allocation3], 1
    %2079 = vsyncpa %s2078, 1
    %2080 = vsyncpa [#allocation6], 1
    %s2081 = scalar_lea.sflag [#allocation6], 1
    %2082 = vsyncpa %s2081, 1
    %2083 = vsyncpa [#allocation9], 1
    %2084 = vsyncpa [#allocation4], 1
    %s2085 = scalar_lea.sflag [#allocation4], 1
    %2086 = vsyncpa %s2085, 1

</llo_original>
